<compile_context>
chip_gen: v5e
topology: v5e:2x2
jax: 0.10.0
libtpu: 0.0.40
codegen_flags: <defaults>
</compile_context>

<pallas_src>
import jax
import jax.numpy as jnp
from jax.experimental import pallas as pl
from jax.experimental.pallas import tpu as pltpu

# Scale(scale=scale_val) learnable scalars are initialized to scale_val = 1.0
scale_val = 1.0


# ---------------------------------------------------------------------------
# position info (same math as _generate_position_info / _linear_map, is_norm=True)
# ---------------------------------------------------------------------------
def _position_info(Hc, Wc):
    lin_h = jnp.arange(Hc, dtype=jnp.float32)
    lin_w = jnp.arange(Wc, dtype=jnp.float32)
    gh = jnp.broadcast_to(lin_h[:, None], (Hc, Wc))
    gw = jnp.broadcast_to(lin_w[None, :], (Hc, Wc))
    gh = jnp.abs(gh - Hc // 2 + 0.5) if Hc % 2 == 0 else jnp.abs(gh - Hc // 2)
    gw = jnp.abs(gw - Wc // 2 + 0.5) if Wc % 2 == 0 else jnp.abs(gw - Wc // 2)
    gh = gh / float(Hc // 2)
    gw = gw / float(Wc // 2)
    polar = jnp.sqrt(gh ** 2 + gw ** 2)
    # _linear_map(polar, [-1, 1])
    k = 2.0 / (jnp.max(polar) - jnp.min(polar))
    b = 1.0 - jnp.max(polar) * k
    polar = k * polar + b
    return gh, gw, polar


# ---------------------------------------------------------------------------
# Pallas kernel
# ---------------------------------------------------------------------------
def _make_kernel(Cb, WO):
    LN = 128                 # lanes; flat layout = plain row-major flatten of (HO, WO) -> (8, 128)

    def kernel(p_ref, w_ref, attc_ref, mask_ref, scal_ref, out_ref):
        f32 = jnp.float32
        P = p_ref[0]                                                   # (ntap*8, 128) bf16

        # ---- ONE MXU matmul: transposed conv (both branches, bias/BN folded) stacked with
        #      the combined 1x1-attention / channel-mean weights ----
        YZ = jnp.dot(w_ref[...], P, preferred_element_type=f32)       # (2*Cb*8 + 32, 128)
        nY = 2 * Cb * 8

        def chan(c):                                                   # (8, 128) tile-aligned slice
            return YZ[c * 8:(c + 1) * 8, :]

        attr_lin_a = YZ[nY + 0:nY + 8]
        attr_lin_b = YZ[nY + 8:nY + 16]
        mean_a = YZ[nY + 16:nY + 24]
        mean_b = YZ[nY + 24:nY + 32]

        # ---- channel max reductions ----
        mx_a = chan(0)
        mx_b = chan(Cb)
        for c in range(1, Cb):
            mx_a = jnp.maximum(mx_a, chan(c))
            mx_b = jnp.maximum(mx_b, chan(Cb + c))

        # ---- 3x3 attention conv (padding=1) in flat layout via roll + precomputed masks ----
        m_w_hi = mask_ref[0]      # ow+1 in range
        m_w_lo = mask_ref[1]      # ow-1 in range
        m_dn_a = mask_ref[2]      # oh+1: same sublane
        m_dn_b = mask_ref[3]      # oh+1: next sublane
        m_up_a = mask_ref[4]      # oh-1: same sublane
        m_up_b = mask_ref[5]      # oh-1: previous sublane

        def shift_w(y, dw):        # value of y at (oh, ow+dw), zero-padded
            if dw == 0:
                return y
            if dw == 1:
                return m_w_hi * pltpu.roll(y, LN - 1, axis=1)
            return m_w_lo * pltpu.roll(y, 1, axis=1)

        def shift_h(y, dh):        # value of y at (oh+dh, ow), zero-padded
            if dh == 0:
                return y
            if dh == 1:
                a = pltpu.roll(y, LN - WO, axis=1)                     # same sublane, +WO lanes
                return m_dn_a * a + m_dn_b * pltpu.roll(a, 7, axis=0)  # or next sublane
            a = pltpu.roll(y, WO, axis=1)
            return m_up_a * a + m_up_b * pltpu.roll(a, 1, axis=0)

        def conv3(plane, base):    # 3x3 cross-correlation, scalar weights from SMEM
            acc = None
            for kh in range(3):
                row = shift_h(plane, kh - 1)
                for kw in range(3):
                    term = scal_ref[base + kh * 3 + kw] * shift_w(row, kw - 1)
                    acc = term if acc is None else acc + term
            return acc

        # constant channels (position-bias map and +/-polar) pre-convolved in the wrapper
        att_a = attc_ref[0] + conv3(attr_lin_a, 0) + conv3(mx_a, 9) + conv3(mean_a, 18)
        att_b = attc_ref[1] + conv3(attr_lin_b, 27) + conv3(mx_b, 36) + conv3(mean_b, 45)

        # ---- sigmoid gating on the EUP (sigmoid(x) = 0.5*tanh(x/2)+0.5), concat, store ----
        scale_1 = scal_ref[54]
        scale_2 = scal_ref[55]
        mod_a = 1.0 + scale_1 * (0.5 * jnp.tanh(0.5 * att_a) + 0.5)
        mod_b = 1.0 + scale_2 * (0.5 * jnp.tanh(0.5 * att_b) + 0.5)
        for c in range(Cb):
            out_ref[0, c, :, :] = chan(c) * mod_a                      # full (8,128) tile stores
            out_ref[0, Cb + c, :, :] = chan(Cb + c) * mod_b

    return kernel


# ---------------------------------------------------------------------------
# factory: all input-independent folding done ONCE here; returns a jitted forward
# ---------------------------------------------------------------------------
def make_attention_conv_transpose2d(p, *, kernel_size, stride, padding,
                                    output_padding, dilation=1, in_shape):
    B, Cin, H, W = in_shape
    K = kernel_size
    Cb = p['Wt_a'].shape[1]
    Cout = 2 * Cb
    assert dilation == 1, "Pallas path implemented for dilation=1"
    HO = (H - 1) * stride - 2 * padding + dilation * (K - 1) + output_padding + 1
    WO = (W - 1) * stride - 2 * padding + dilation * (K - 1) + output_padding + 1
    plo = dilation * (K - 1) - padding
    phi = plo + output_padding
    assert plo >= 0, "padding too large for this simple glue path"
    assert HO * WO == 1024 and 128 % WO == 0 and HO % 8 == 0, \
        "flat (8,128) layout requires HO*WO == 1024 with WO | 128"

    gh, gw, polar = _position_info(HO, WO)

    # --- fold conv bias + branch BatchNorm (eps=1e-3) into per-channel scale/shift ---
    eps_bn = 1e-3
    sa = p['gamma_a'] / jnp.sqrt(p['var_a'] + eps_bn)
    ta = p['beta_a'] + (p['bias_a'] - p['mean_a']) * sa
    sb = p['gamma_b'] / jnp.sqrt(p['var_b'] + eps_bn)
    tb = p['beta_b'] + (p['bias_b'] - p['mean_b']) * sb

    # --- fold the 1x1 attention conv bias + its BatchNorm2d(1) (eps=1e-5) ---
    eps1 = 1e-5
    s1a = p['att_gamma_a'] / jnp.sqrt(p['att_var_a'] + eps1)
    s1b = p['att_gamma_b'] / jnp.sqrt(p['att_var_b'] + eps1)
    wca1, wcb1 = p['w_att_a'], p['w_att_b']       # (Cb+2,)
    watta = s1a * wca1[:Cb]
    wattb = s1b * wcb1[:Cb]
    abias_a = s1a * (wca1[Cb] * gh + wca1[Cb + 1] * gw + p['b_att_a']
                     - p['att_mean_a']) + p['att_beta_a']
    abias_b = s1b * (wcb1[Cb] * (1.0 - gh) + wcb1[Cb + 1] * (1.0 - gw) + p['b_att_b']
                     - p['att_mean_b']) + p['att_beta_b']

    # --- transposed-conv weights -> direct-conv weights (flipped), BN scale folded in ---
    # taps = Cin*K*K patches + 1 ones-row (carries bias/BN shift) + 1 zero pad row
    # (pad keeps ntap*8 a multiple of 16 for bf16 sublane packing)
    ntap = Cin * K * K + 2
    wflip_a = p['Wt_a'][:, :, ::-1, ::-1]                               # (Cin, Cb, K, K)
    wflip_b = p['Wt_b'][:, :, ::-1, ::-1]
    wc_a = jnp.transpose(wflip_a, (1, 0, 2, 3)).reshape(Cb, Cin * K * K) * sa[:, None]
    wc_b = jnp.transpose(wflip_b, (1, 0, 2, 3)).reshape(Cb, Cin * K * K) * sb[:, None]
    zcol = jnp.zeros((Cb, 1), jnp.float32)
    wcoef = jnp.concatenate(
        [jnp.concatenate([wc_a, ta[:, None], zcol], axis=1),
         jnp.concatenate([wc_b, tb[:, None], zcol], axis=1)], axis=0)   # (2Cb, ntap)
    eye8 = jnp.eye(8, dtype=jnp.float32)
    w_exp = (wcoef[:, None, :, None] * eye8[None, :, None, :]).reshape(2 * Cb * 8, ntap * 8)

    # --- 1x1-attention linear part + per-branch channel means, merged into the same matmul:
    #     W2combined = w2_exp @ w_exp, stacked under w_exp -> ONE MXU dot in the kernel ---
    v = jnp.zeros((4, 2 * Cb), jnp.float32)
    v = v.at[0, 0:Cb].set(watta)
    v = v.at[1, Cb:2 * Cb].set(wattb)
    v = v.at[2, 0:Cb].set(1.0 / Cb)
    v = v.at[3, Cb:2 * Cb].set(1.0 / Cb)
    w2_exp = (v[:, None, :, None] * eye8[None, :, None, :]).reshape(4 * 8, 2 * Cb * 8)
    w2_comb = jnp.dot(w2_exp, w_exp, precision=jax.lax.Precision.HIGHEST)   # (32, ntap*8)
    w_merged = jnp.concatenate([w_exp, w2_comb], axis=0).astype(jnp.bfloat16)  # (2Cb*8+32, ntap*8)

    # --- constant channels of the 3x3 attention conv (position-bias map and +/-polar),
    #     convolved once here and folded into a per-branch constant map ---
    def conv3_same(maps, w):
        return jax.lax.conv_general_dilated(
            maps[None], w[None], (1, 1), [(1, 1), (1, 1)],
            dimension_numbers=('NCHW', 'OIHW', 'NCHW'),
            precision=jax.lax.Precision.HIGHEST)[0, 0]

    attc_a = conv3_same(jnp.stack([abias_a, polar]),
                        jnp.stack([p['w_attn_a'][0], p['w_attn_a'][3]]))
    attc_b = conv3_same(jnp.stack([abias_b, -polar]),
                        jnp.stack([p['w_attn_b'][0], p['w_attn_b'][3]]))
    att_const = jnp.stack([attc_a, attc_b]).reshape(2, 8, 128)

    # --- 3x3 weights for the data-dependent channels + learnable scale_1/scale_2 -> SMEM ---
    scal = jnp.concatenate(
        [p['w_attn_a'][0:3].reshape(-1),
         p['w_attn_b'][0:3].reshape(-1),
         jnp.asarray(p['scale_1'], jnp.float32).reshape(1),
         jnp.asarray(p['scale_2'], jnp.float32).reshape(1)]).astype(jnp.float32)   # (56,)

    # --- boundary masks for the in-register 3x3 shifts (constants, hoisted out of kernel) ---
    lane = jax.lax.broadcasted_iota(jnp.int32, (8, 128), 1)
    sub = jax.lax.broadcasted_iota(jnp.int32, (8, 128), 0)
    ow = lane % WO
    masks = jnp.stack([
        (ow != (WO - 1)),                                   # ow+1 in range
        (ow != 0),                                          # ow-1 in range
        (lane < (128 - WO)),                                # oh+1: stays in sublane
        jnp.logical_and(lane >= (128 - WO), sub < 7),       # oh+1: next sublane
        (lane >= WO),                                       # oh-1: stays in sublane
        jnp.logical_and(lane < WO, sub >= 1),               # oh-1: previous sublane
    ]).astype(jnp.float32)                                  # (6, 8, 128)

    kernel = _make_kernel(Cb, WO)
    smem = pl.BlockSpec(memory_space=pltpu.MemorySpace.SMEM)
    krows = ntap * 8
    wrows = 2 * Cb * 8 + 32

    grid_spec = pltpu.PrefetchScalarGridSpec(
        num_scalar_prefetch=0,
        grid=(B,),                                          # 1 image / step: >= 2 parallel steps
        in_specs=[                                          #   for v7x's two TensorCores (B=2)
            pl.BlockSpec((1, krows, 128), lambda b: (b, 0, 0)),   # per-image bf16 patch slab
            pl.BlockSpec((wrows, krows), lambda b: (0, 0)),       # merged bf16 weight slab
            pl.BlockSpec((2, 8, 128), lambda b: (0, 0, 0)),       # constant attention maps
            pl.BlockSpec((6, 8, 128), lambda b: (0, 0, 0)),       # boundary masks
            smem,                                                 # 3x3 weights + scales
        ],
        out_specs=pl.BlockSpec((1, Cout, 8, 128), lambda b: (b, 0, 0, 0)),
    )

    pallas_fn = pl.pallas_call(
        kernel,
        out_shape=jax.ShapeDtypeStruct((B, Cout, 8, 128), jnp.float32),
        grid_spec=grid_spec,
        compiler_params=pltpu.CompilerParams(
            dimension_semantics=("parallel",),               # batch axis: megacore-shardable
            vmem_limit_bytes=32 * 1024 * 1024),              # harmless guard on v5e/v6e/v7x
    )

    Hd, Wd = (H - 1) * stride + 1, (W - 1) * stride + 1

    @jax.jit
    def forward(x):
        # per-call work: zero-dilate, pad, im2col into the lane-dense bf16 patch slab
        xd = jnp.zeros((B, Cin, Hd, Wd), jnp.float32).at[:, :, ::stride, ::stride].set(x)
        xp = jnp.pad(xd, ((0, 0), (0, 0), (plo, phi), (plo, phi)))
        pat = jnp.stack([xp[:, ci, kh:kh + HO, kw:kw + WO]
                         for ci in range(Cin) for kh in range(K) for kw in range(K)],
                        axis=1)                                                # (B, Cin*K*K, HO, WO)
        pat = jnp.concatenate([pat,
                               jnp.ones((B, 1, HO, WO), jnp.float32),          # bias carrier
                               jnp.zeros((B, 1, HO, WO), jnp.float32)], axis=1)  # bf16 align pad
        p2 = pat.reshape(B, krows, 128).astype(jnp.bfloat16)
        out_flat = pallas_fn(p2, w_merged, att_const, masks, scal)
        return out_flat.reshape(B, Cout, HO, WO)             # free contiguous un-flatten

    return forward


# ---------------------------------------------------------------------------
# deterministic parameter init (shapes per module __init__; abs() on polar-channel
# weights per init_attention_weight; Scale params init to scale_val)
# ---------------------------------------------------------------------------
def init_params(key, Cin, Cout, K):
    assert Cout % 2 == 0
    Cb = Cout // 2
    ks = iter(jax.random.split(key, 32))
    n = lambda shape, s=1.0: s * jax.random.normal(next(ks), shape, jnp.float32)
    p = {}
    p['Wt_a'] = n((Cin, Cb, K, K), 0.2)          # ConvTranspose2d weight (in, out//2, K, K)
    p['Wt_b'] = n((Cin, Cb, K, K), 0.2)
    p['bias_a'] = n((Cb,), 0.1)
    p['bias_b'] = n((Cb,), 0.1)
    for br in ('a', 'b'):                        # branch BatchNorm (inference stats)
        p[f'gamma_{br}'] = 1.0 + n((Cb,), 0.1)
        p[f'beta_{br}'] = n((Cb,), 0.1)
        p[f'mean_{br}'] = n((Cb,), 0.1)
        p[f'var_{br}'] = 0.5 + jnp.abs(n((Cb,), 0.5))
    for br in ('a', 'b'):                        # 1x1 conv (Cb+2 -> 1) + BatchNorm2d(1)
        p[f'w_att_{br}'] = n((Cb + 2,), 0.3)
        p[f'b_att_{br}'] = n((), 0.1)
        p[f'att_gamma_{br}'] = 1.0 + n((), 0.1)
        p[f'att_beta_{br}'] = n((), 0.1)
        p[f'att_mean_{br}'] = n((), 0.1)
        p[f'att_var_{br}'] = 0.5 + jnp.abs(n((), 0.5))
    for br in ('a', 'b'):                        # 3x3 conv (4 -> 1), bias=False
        w3 = n((4, 3, 3), 0.3)
        w3 = w3.at[3].set(jnp.abs(w3[3]))        # init_attention_weight(): abs on polar chan
        p[f'w_attn_{br}'] = w3
    p['scale_1'] = jnp.float32(scale_val)        # Scale(scale=scale_val) learnable scalars
    p['scale_2'] = jnp.float32(scale_val)
    return p


# ---------------------------------------------------------------------------
# pure-JAX reference (for self-check)
# ---------------------------------------------------------------------------
def reference_forward(x, p, *, K, stride, padding, output_padding, dilation=1):
    plo = dilation * (K - 1) - padding
    phi = plo + output_padding
    HI = jax.lax.Precision.HIGHEST

    def tconv(x, Wt, bias):
        w_oihw = jnp.transpose(Wt, (1, 0, 2, 3))[:, :, ::-1, ::-1]
        y = jax.lax.conv_general_dilated(
            x, w_oihw, window_strides=(1, 1), padding=[(plo, phi), (plo, phi)],
            lhs_dilation=(stride, stride), rhs_dilation=(dilation, dilation),
            dimension_numbers=('NCHW', 'OIHW', 'NCHW'), precision=HI)
        return y + bias[None, :, None, None]

    def bn(y, g, b, m, v, eps):
        return (y - m[None, :, None, None]) / jnp.sqrt(v[None, :, None, None] + eps) \
               * g[None, :, None, None] + b[None, :, None, None]

    xa = bn(tconv(x, p['Wt_a'], p['bias_a']),
            p['gamma_a'], p['beta_a'], p['mean_a'], p['var_a'], 1e-3)
    xb = bn(tconv(x, p['Wt_b'], p['bias_b']),
            p['gamma_b'], p['beta_b'], p['mean_b'], p['var_b'], 1e-3)
    B, _, HO, WO = xa.shape
    gh, gw, polar = _position_info(HO, WO)
    gh_b = jnp.broadcast_to(gh, (B, 1, HO, WO))
    gw_b = jnp.broadcast_to(gw, (B, 1, HO, WO))
    polar_b = jnp.broadcast_to(polar, (B, 1, HO, WO))

    def att1x1(feat, w, b, g, bb, m, v):
        y = jnp.einsum('bchw,c->bhw', feat, w, precision=HI)[:, None] + b
        return (y - m) / jnp.sqrt(v + 1e-5) * g + bb

    attr_a = att1x1(jnp.concatenate([xa, gh_b, gw_b], 1), p['w_att_a'], p['b_att_a'],
                    p['att_gamma_a'], p['att_beta_a'], p['att_mean_a'], p['att_var_a'])
    attr_b = att1x1(jnp.concatenate([xb, 1.0 - gh_b, 1.0 - gw_b], 1), p['w_att_b'], p['b_att_b'],
                    p['att_gamma_b'], p['att_beta_b'], p['att_mean_b'], p['att_var_b'])

    def conv3(feat, w):
        return jax.lax.conv_general_dilated(
            feat, w[None], (1, 1), [(1, 1), (1, 1)],
            dimension_numbers=('NCHW', 'OIHW', 'NCHW'), precision=HI)

    ai = jnp.concatenate([attr_a, jnp.max(xa, 1, keepdims=True),
                          jnp.mean(xa, 1, keepdims=True), polar_b], 1)
    bi = jnp.concatenate([attr_b, jnp.max(xb, 1, keepdims=True),
                          jnp.mean(xb, 1, keepdims=True), -polar_b], 1)
    att_a = conv3(ai, p['w_attn_a'])
    att_b = conv3(bi, p['w_attn_b'])
    xa = (1.0 + p['scale_1'] * jax.nn.sigmoid(att_a)) * xa
    xb = (1.0 + p['scale_2'] * jax.nn.sigmoid(att_b)) * xb
    return jnp.concatenate([xa, xb], 1)


if __name__ == "__main__":
    B, Cin, H, W = 2, 4, 16, 16
    out_channels = 8
    K, stride, padding, output_padding = 3, 2, 1, 1

    root = jax.random.PRNGKey(0)
    kx, kp = jax.random.split(root)
    params = init_params(kp, Cin, out_channels, K)
    x = jax.random.normal(kx, (B, Cin, H, W), jnp.float32)

    forward = make_attention_conv_transpose2d(
        params, kernel_size=K, stride=stride, padding=padding,
        output_padding=output_padding, in_shape=(B, Cin, H, W))

    out = jax.block_until_ready(forward(x))

    ref = reference_forward(x, params, K=K, stride=stride, padding=padding,
                            output_padding=output_padding)
    assert out.shape == (B, out_channels, 2 * H, 2 * W), out.shape
    err = float(jnp.max(jnp.abs(out - ref)))
    # bf16 MXU operands (f32 accumulation) => slightly relaxed tolerance vs the f32 path
    assert err < 5e-2, f"max abs err {err}"
    print("KERNEL_OK")
</pallas_src>

<mosaic_0001>
module attributes {stable_mosaic.version = 11 : i64} {
  func.func @kernel(%arg0: i32, %arg1: memref<1x304x128xbf16, #tpu.memory_space<vmem>>, %arg2: memref<96x304xbf16, #tpu.memory_space<vmem>>, %arg3: memref<2x8x128xf32, #tpu.memory_space<vmem>>, %arg4: memref<6x8x128xf32, #tpu.memory_space<vmem>>, %arg5: memref<56xf32, #tpu.memory_space<smem>>, %arg6: memref<1x8x8x128xf32, #tpu.memory_space<vmem>>) attributes {dimension_semantics = [#tpu.dimension_semantics<parallel>], iteration_bounds = array<i64: 2>, scalar_prefetch = 0 : i64, scratch_operands = 0 : i64, tpu.core_type = #tpu.core_type<tc>, window_params = [{transform_indices = @transform_0, window_bounds = array<i64: 1, 304, 128>}, {pipeline_mode = #tpu.pipeline_mode<synchronous>, transform_indices = @transform_1, window_bounds = array<i64: 96, 304>}, {pipeline_mode = #tpu.pipeline_mode<synchronous>, transform_indices = @transform_2, window_bounds = array<i64: 2, 8, 128>}, {pipeline_mode = #tpu.pipeline_mode<synchronous>, transform_indices = @transform_3, window_bounds = array<i64: 6, 8, 128>}, {transform_indices = @transform_4, window_bounds = array<i64: 56>}, {transform_indices = @transform_5, window_bounds = array<i64: 1, 8, 8, 128>}]} {
    %c0 = arith.constant 0 : index
    %c0_0 = arith.constant 0 : index
    %c0_1 = arith.constant 0 : index
    %0 = vector.load %arg1[%c0, %c0_0, %c0_1] : memref<1x304x128xbf16, #tpu.memory_space<vmem>>, vector<1x304x128xbf16>
    %1 = vector.shape_cast %0 : vector<1x304x128xbf16> to vector<304x128xbf16>
    %c0_2 = arith.constant 0 : index
    %c0_3 = arith.constant 0 : index
    %2 = vector.load %arg2[%c0_2, %c0_3] : memref<96x304xbf16, #tpu.memory_space<vmem>>, vector<96x304xbf16>
    %cst = arith.constant dense<0.000000e+00> : vector<96x128xf32>
    %3 = tpu.matmul %2, %1, %cst {dimension_numbers = #tpu.dot_dimension_numbers<[1], [0], [0], [1], [0, 0, 1, 1], [], []>} : vector<96x304xbf16>, vector<304x128xbf16>, vector<96x128xf32> -> vector<96x128xf32>
    %4 = vector.extract_strided_slice %3 {offsets = [64, 0], sizes = [8, 128], strides = [1, 1]} : vector<96x128xf32> to vector<8x128xf32>
    %5 = vector.extract_strided_slice %3 {offsets = [72, 0], sizes = [8, 128], strides = [1, 1]} : vector<96x128xf32> to vector<8x128xf32>
    %6 = vector.extract_strided_slice %3 {offsets = [80, 0], sizes = [8, 128], strides = [1, 1]} : vector<96x128xf32> to vector<8x128xf32>
    %7 = vector.extract_strided_slice %3 {offsets = [88, 0], sizes = [8, 128], strides = [1, 1]} : vector<96x128xf32> to vector<8x128xf32>
    %8 = vector.extract_strided_slice %3 {offsets = [0, 0], sizes = [8, 128], strides = [1, 1]} : vector<96x128xf32> to vector<8x128xf32>
    %9 = vector.extract_strided_slice %3 {offsets = [32, 0], sizes = [8, 128], strides = [1, 1]} : vector<96x128xf32> to vector<8x128xf32>
    %10 = vector.extract_strided_slice %3 {offsets = [8, 0], sizes = [8, 128], strides = [1, 1]} : vector<96x128xf32> to vector<8x128xf32>
    %11 = arith.maximumf %8, %10 : vector<8x128xf32>
    %12 = vector.extract_strided_slice %3 {offsets = [40, 0], sizes = [8, 128], strides = [1, 1]} : vector<96x128xf32> to vector<8x128xf32>
    %13 = arith.maximumf %9, %12 : vector<8x128xf32>
    %14 = vector.extract_strided_slice %3 {offsets = [16, 0], sizes = [8, 128], strides = [1, 1]} : vector<96x128xf32> to vector<8x128xf32>
    %15 = arith.maximumf %11, %14 : vector<8x128xf32>
    %16 = vector.extract_strided_slice %3 {offsets = [48, 0], sizes = [8, 128], strides = [1, 1]} : vector<96x128xf32> to vector<8x128xf32>
    %17 = arith.maximumf %13, %16 : vector<8x128xf32>
    %18 = vector.extract_strided_slice %3 {offsets = [24, 0], sizes = [8, 128], strides = [1, 1]} : vector<96x128xf32> to vector<8x128xf32>
    %19 = arith.maximumf %15, %18 : vector<8x128xf32>
    %20 = vector.extract_strided_slice %3 {offsets = [56, 0], sizes = [8, 128], strides = [1, 1]} : vector<96x128xf32> to vector<8x128xf32>
    %21 = arith.maximumf %17, %20 : vector<8x128xf32>
    %c0_4 = arith.constant 0 : index
    %c0_5 = arith.constant 0 : index
    %c0_6 = arith.constant 0 : index
    %22 = vector.load %arg4[%c0_4, %c0_5, %c0_6] : memref<6x8x128xf32, #tpu.memory_space<vmem>>, vector<1x8x128xf32>
    %23 = vector.shape_cast %22 : vector<1x8x128xf32> to vector<8x128xf32>
    %c1 = arith.constant 1 : index
    %c0_7 = arith.constant 0 : index
    %c0_8 = arith.constant 0 : index
    %24 = vector.load %arg4[%c1, %c0_7, %c0_8] : memref<6x8x128xf32, #tpu.memory_space<vmem>>, vector<1x8x128xf32>
    %25 = vector.shape_cast %24 : vector<1x8x128xf32> to vector<8x128xf32>
    %c2 = arith.constant 2 : index
    %c0_9 = arith.constant 0 : index
    %c0_10 = arith.constant 0 : index
    %26 = vector.load %arg4[%c2, %c0_9, %c0_10] : memref<6x8x128xf32, #tpu.memory_space<vmem>>, vector<1x8x128xf32>
    %27 = vector.shape_cast %26 : vector<1x8x128xf32> to vector<8x128xf32>
    %c3 = arith.constant 3 : index
    %c0_11 = arith.constant 0 : index
    %c0_12 = arith.constant 0 : index
    %28 = vector.load %arg4[%c3, %c0_11, %c0_12] : memref<6x8x128xf32, #tpu.memory_space<vmem>>, vector<1x8x128xf32>
    %29 = vector.shape_cast %28 : vector<1x8x128xf32> to vector<8x128xf32>
    %c4 = arith.constant 4 : index
    %c0_13 = arith.constant 0 : index
    %c0_14 = arith.constant 0 : index
    %30 = vector.load %arg4[%c4, %c0_13, %c0_14] : memref<6x8x128xf32, #tpu.memory_space<vmem>>, vector<1x8x128xf32>
    %31 = vector.shape_cast %30 : vector<1x8x128xf32> to vector<8x128xf32>
    %c5 = arith.constant 5 : index
    %c0_15 = arith.constant 0 : index
    %c0_16 = arith.constant 0 : index
    %32 = vector.load %arg4[%c5, %c0_15, %c0_16] : memref<6x8x128xf32, #tpu.memory_space<vmem>>, vector<1x8x128xf32>
    %33 = vector.shape_cast %32 : vector<1x8x128xf32> to vector<8x128xf32>
    %c0_17 = arith.constant 0 : index
    %c0_18 = arith.constant 0 : index
    %c0_19 = arith.constant 0 : index
    %34 = vector.load %arg3[%c0_17, %c0_18, %c0_19] : memref<2x8x128xf32, #tpu.memory_space<vmem>>, vector<1x8x128xf32>
    %35 = vector.shape_cast %34 : vector<1x8x128xf32> to vector<8x128xf32>
    %c32_i32 = arith.constant 32 : i32
    %36 = tpu.dynamic_rotate %4 by %c32_i32 dim 1 : vector<8x128xf32>, i32 -> vector<8x128xf32>
    %37 = arith.mulf %31, %36 : vector<8x128xf32>
    %c1_i32 = arith.constant 1 : i32
    %38 = tpu.dynamic_rotate %36 by %c1_i32 dim 0 : vector<8x128xf32>, i32 -> vector<8x128xf32>
    %39 = arith.mulf %33, %38 : vector<8x128xf32>
    %40 = arith.addf %37, %39 : vector<8x128xf32>
    %c0_20 = arith.constant 0 : index
    %41 = memref.load %arg5[%c0_20] : memref<56xf32, #tpu.memory_space<smem>>
    %c1_i32_21 = arith.constant 1 : i32
    %42 = tpu.dynamic_rotate %40 by %c1_i32_21 dim 1 : vector<8x128xf32>, i32 -> vector<8x128xf32>
    %43 = arith.mulf %25, %42 : vector<8x128xf32>
    %44 = vector.broadcast %41 : f32 to vector<8x128xf32>
    %45 = arith.mulf %44, %43 : vector<8x128xf32>
    %c1_22 = arith.constant 1 : index
    %46 = memref.load %arg5[%c1_22] : memref<56xf32, #tpu.memory_space<smem>>
    %47 = vector.broadcast %46 : f32 to vector<8x128xf32>
    %48 = arith.mulf %47, %40 : vector<8x128xf32>
    %49 = arith.addf %45, %48 : vector<8x128xf32>
    %c2_23 = arith.constant 2 : index
    %50 = memref.load %arg5[%c2_23] : memref<56xf32, #tpu.memory_space<smem>>
    %c127_i32 = arith.constant 127 : i32
    %51 = tpu.dynamic_rotate %40 by %c127_i32 dim 1 : vector<8x128xf32>, i32 -> vector<8x128xf32>
    %52 = arith.mulf %23, %51 : vector<8x128xf32>
    %53 = vector.broadcast %50 : f32 to vector<8x128xf32>
    %54 = arith.mulf %53, %52 : vector<8x128xf32>
    %55 = arith.addf %49, %54 : vector<8x128xf32>
    %c3_24 = arith.constant 3 : index
    %56 = memref.load %arg5[%c3_24] : memref<56xf32, #tpu.memory_space<smem>>
    %c1_i32_25 = arith.constant 1 : i32
    %57 = tpu.dynamic_rotate %4 by %c1_i32_25 dim 1 : vector<8x128xf32>, i32 -> vector<8x128xf32>
    %58 = arith.mulf %25, %57 : vector<8x128xf32>
    %59 = vector.broadcast %56 : f32 to vector<8x128xf32>
    %60 = arith.mulf %59, %58 : vector<8x128xf32>
    %61 = arith.addf %55, %60 : vector<8x128xf32>
    %c4_26 = arith.constant 4 : index
    %62 = memref.load %arg5[%c4_26] : memref<56xf32, #tpu.memory_space<smem>>
    %63 = vector.broadcast %62 : f32 to vector<8x128xf32>
    %64 = arith.mulf %63, %4 : vector<8x128xf32>
    %65 = arith.addf %61, %64 : vector<8x128xf32>
    %c5_27 = arith.constant 5 : index
    %66 = memref.load %arg5[%c5_27] : memref<56xf32, #tpu.memory_space<smem>>
    %c127_i32_28 = arith.constant 127 : i32
    %67 = tpu.dynamic_rotate %4 by %c127_i32_28 dim 1 : vector<8x128xf32>, i32 -> vector<8x128xf32>
    %68 = arith.mulf %23, %67 : vector<8x128xf32>
    %69 = vector.broadcast %66 : f32 to vector<8x128xf32>
    %70 = arith.mulf %69, %68 : vector<8x128xf32>
    %71 = arith.addf %65, %70 : vector<8x128xf32>
    %c96_i32 = arith.constant 96 : i32
    %72 = tpu.dynamic_rotate %4 by %c96_i32 dim 1 : vector<8x128xf32>, i32 -> vector<8x128xf32>
    %73 = arith.mulf %27, %72 : vector<8x128xf32>
    %c7_i32 = arith.constant 7 : i32
    %74 = tpu.dynamic_rotate %72 by %c7_i32 dim 0 : vector<8x128xf32>, i32 -> vector<8x128xf32>
    %75 = arith.mulf %29, %74 : vector<8x128xf32>
    %76 = arith.addf %73, %75 : vector<8x128xf32>
    %c6 = arith.constant 6 : index
    %77 = memref.load %arg5[%c6] : memref<56xf32, #tpu.memory_space<smem>>
    %c1_i32_29 = arith.constant 1 : i32
    %78 = tpu.dynamic_rotate %76 by %c1_i32_29 dim 1 : vector<8x128xf32>, i32 -> vector<8x128xf32>
    %79 = arith.mulf %25, %78 : vector<8x128xf32>
    %80 = vector.broadcast %77 : f32 to vector<8x128xf32>
    %81 = arith.mulf %80, %79 : vector<8x128xf32>
    %82 = arith.addf %71, %81 : vector<8x128xf32>
    %c7 = arith.constant 7 : index
    %83 = memref.load %arg5[%c7] : memref<56xf32, #tpu.memory_space<smem>>
    %84 = vector.broadcast %83 : f32 to vector<8x128xf32>
    %85 = arith.mulf %84, %76 : vector<8x128xf32>
    %86 = arith.addf %82, %85 : vector<8x128xf32>
    %c8 = arith.constant 8 : index
    %87 = memref.load %arg5[%c8] : memref<56xf32, #tpu.memory_space<smem>>
    %c127_i32_30 = arith.constant 127 : i32
    %88 = tpu.dynamic_rotate %76 by %c127_i32_30 dim 1 : vector<8x128xf32>, i32 -> vector<8x128xf32>
    %89 = arith.mulf %23, %88 : vector<8x128xf32>
    %90 = vector.broadcast %87 : f32 to vector<8x128xf32>
    %91 = arith.mulf %90, %89 : vector<8x128xf32>
    %92 = arith.addf %86, %91 : vector<8x128xf32>
    %93 = arith.addf %35, %92 : vector<8x128xf32>
    %c32_i32_31 = arith.constant 32 : i32
    %94 = tpu.dynamic_rotate %19 by %c32_i32_31 dim 1 : vector<8x128xf32>, i32 -> vector<8x128xf32>
    %95 = arith.mulf %31, %94 : vector<8x128xf32>
    %c1_i32_32 = arith.constant 1 : i32
    %96 = tpu.dynamic_rotate %94 by %c1_i32_32 dim 0 : vector<8x128xf32>, i32 -> vector<8x128xf32>
    %97 = arith.mulf %33, %96 : vector<8x128xf32>
    %98 = arith.addf %95, %97 : vector<8x128xf32>
    %c9 = arith.constant 9 : index
    %99 = memref.load %arg5[%c9] : memref<56xf32, #tpu.memory_space<smem>>
    %c1_i32_33 = arith.constant 1 : i32
    %100 = tpu.dynamic_rotate %98 by %c1_i32_33 dim 1 : vector<8x128xf32>, i32 -> vector<8x128xf32>
    %101 = arith.mulf %25, %100 : vector<8x128xf32>
    %102 = vector.broadcast %99 : f32 to vector<8x128xf32>
    %103 = arith.mulf %102, %101 : vector<8x128xf32>
    %c10 = arith.constant 10 : index
    %104 = memref.load %arg5[%c10] : memref<56xf32, #tpu.memory_space<smem>>
    %105 = vector.broadcast %104 : f32 to vector<8x128xf32>
    %106 = arith.mulf %105, %98 : vector<8x128xf32>
    %107 = arith.addf %103, %106 : vector<8x128xf32>
    %c11 = arith.constant 11 : index
    %108 = memref.load %arg5[%c11] : memref<56xf32, #tpu.memory_space<smem>>
    %c127_i32_34 = arith.constant 127 : i32
    %109 = tpu.dynamic_rotate %98 by %c127_i32_34 dim 1 : vector<8x128xf32>, i32 -> vector<8x128xf32>
    %110 = arith.mulf %23, %109 : vector<8x128xf32>
    %111 = vector.broadcast %108 : f32 to vector<8x128xf32>
    %112 = arith.mulf %111, %110 : vector<8x128xf32>
    %113 = arith.addf %107, %112 : vector<8x128xf32>
    %c12 = arith.constant 12 : index
    %114 = memref.load %arg5[%c12] : memref<56xf32, #tpu.memory_space<smem>>
    %c1_i32_35 = arith.constant 1 : i32
    %115 = tpu.dynamic_rotate %19 by %c1_i32_35 dim 1 : vector<8x128xf32>, i32 -> vector<8x128xf32>
    %116 = arith.mulf %25, %115 : vector<8x128xf32>
    %117 = vector.broadcast %114 : f32 to vector<8x128xf32>
    %118 = arith.mulf %117, %116 : vector<8x128xf32>
    %119 = arith.addf %113, %118 : vector<8x128xf32>
    %c13 = arith.constant 13 : index
    %120 = memref.load %arg5[%c13] : memref<56xf32, #tpu.memory_space<smem>>
    %121 = vector.broadcast %120 : f32 to vector<8x128xf32>
    %122 = arith.mulf %121, %19 : vector<8x128xf32>
    %123 = arith.addf %119, %122 : vector<8x128xf32>
    %c14 = arith.constant 14 : index
    %124 = memref.load %arg5[%c14] : memref<56xf32, #tpu.memory_space<smem>>
    %c127_i32_36 = arith.constant 127 : i32
    %125 = tpu.dynamic_rotate %19 by %c127_i32_36 dim 1 : vector<8x128xf32>, i32 -> vector<8x128xf32>
    %126 = arith.mulf %23, %125 : vector<8x128xf32>
    %127 = vector.broadcast %124 : f32 to vector<8x128xf32>
    %128 = arith.mulf %127, %126 : vector<8x128xf32>
    %129 = arith.addf %123, %128 : vector<8x128xf32>
    %c96_i32_37 = arith.constant 96 : i32
    %130 = tpu.dynamic_rotate %19 by %c96_i32_37 dim 1 : vector<8x128xf32>, i32 -> vector<8x128xf32>
    %131 = arith.mulf %27, %130 : vector<8x128xf32>
    %c7_i32_38 = arith.constant 7 : i32
    %132 = tpu.dynamic_rotate %130 by %c7_i32_38 dim 0 : vector<8x128xf32>, i32 -> vector<8x128xf32>
    %133 = arith.mulf %29, %132 : vector<8x128xf32>
    %134 = arith.addf %131, %133 : vector<8x128xf32>
    %c15 = arith.constant 15 : index
    %135 = memref.load %arg5[%c15] : memref<56xf32, #tpu.memory_space<smem>>
    %c1_i32_39 = arith.constant 1 : i32
    %136 = tpu.dynamic_rotate %134 by %c1_i32_39 dim 1 : vector<8x128xf32>, i32 -> vector<8x128xf32>
    %137 = arith.mulf %25, %136 : vector<8x128xf32>
    %138 = vector.broadcast %135 : f32 to vector<8x128xf32>
    %139 = arith.mulf %138, %137 : vector<8x128xf32>
    %140 = arith.addf %129, %139 : vector<8x128xf32>
    %c16 = arith.constant 16 : index
    %141 = memref.load %arg5[%c16] : memref<56xf32, #tpu.memory_space<smem>>
    %142 = vector.broadcast %141 : f32 to vector<8x128xf32>
    %143 = arith.mulf %142, %134 : vector<8x128xf32>
    %144 = arith.addf %140, %143 : vector<8x128xf32>
    %c17 = arith.constant 17 : index
    %145 = memref.load %arg5[%c17] : memref<56xf32, #tpu.memory_space<smem>>
    %c127_i32_40 = arith.constant 127 : i32
    %146 = tpu.dynamic_rotate %134 by %c127_i32_40 dim 1 : vector<8x128xf32>, i32 -> vector<8x128xf32>
    %147 = arith.mulf %23, %146 : vector<8x128xf32>
    %148 = vector.broadcast %145 : f32 to vector<8x128xf32>
    %149 = arith.mulf %148, %147 : vector<8x128xf32>
    %150 = arith.addf %144, %149 : vector<8x128xf32>
    %151 = arith.addf %93, %150 : vector<8x128xf32>
    %c32_i32_41 = arith.constant 32 : i32
    %152 = tpu.dynamic_rotate %6 by %c32_i32_41 dim 1 : vector<8x128xf32>, i32 -> vector<8x128xf32>
    %153 = arith.mulf %31, %152 : vector<8x128xf32>
    %c1_i32_42 = arith.constant 1 : i32
    %154 = tpu.dynamic_rotate %152 by %c1_i32_42 dim 0 : vector<8x128xf32>, i32 -> vector<8x128xf32>
    %155 = arith.mulf %33, %154 : vector<8x128xf32>
    %156 = arith.addf %153, %155 : vector<8x128xf32>
    %c18 = arith.constant 18 : index
    %157 = memref.load %arg5[%c18] : memref<56xf32, #tpu.memory_space<smem>>
    %c1_i32_43 = arith.constant 1 : i32
    %158 = tpu.dynamic_rotate %156 by %c1_i32_43 dim 1 : vector<8x128xf32>, i32 -> vector<8x128xf32>
    %159 = arith.mulf %25, %158 : vector<8x128xf32>
    %160 = vector.broadcast %157 : f32 to vector<8x128xf32>
    %161 = arith.mulf %160, %159 : vector<8x128xf32>
    %c19 = arith.constant 19 : index
    %162 = memref.load %arg5[%c19] : memref<56xf32, #tpu.memory_space<smem>>
    %163 = vector.broadcast %162 : f32 to vector<8x128xf32>
    %164 = arith.mulf %163, %156 : vector<8x128xf32>
    %165 = arith.addf %161, %164 : vector<8x128xf32>
    %c20 = arith.constant 20 : index
    %166 = memref.load %arg5[%c20] : memref<56xf32, #tpu.memory_space<smem>>
    %c127_i32_44 = arith.constant 127 : i32
    %167 = tpu.dynamic_rotate %156 by %c127_i32_44 dim 1 : vector<8x128xf32>, i32 -> vector<8x128xf32>
    %168 = arith.mulf %23, %167 : vector<8x128xf32>
    %169 = vector.broadcast %166 : f32 to vector<8x128xf32>
    %170 = arith.mulf %169, %168 : vector<8x128xf32>
    %171 = arith.addf %165, %170 : vector<8x128xf32>
    %c21 = arith.constant 21 : index
    %172 = memref.load %arg5[%c21] : memref<56xf32, #tpu.memory_space<smem>>
    %c1_i32_45 = arith.constant 1 : i32
    %173 = tpu.dynamic_rotate %6 by %c1_i32_45 dim 1 : vector<8x128xf32>, i32 -> vector<8x128xf32>
    %174 = arith.mulf %25, %173 : vector<8x128xf32>
    %175 = vector.broadcast %172 : f32 to vector<8x128xf32>
    %176 = arith.mulf %175, %174 : vector<8x128xf32>
    %177 = arith.addf %171, %176 : vector<8x128xf32>
    %c22 = arith.constant 22 : index
    %178 = memref.load %arg5[%c22] : memref<56xf32, #tpu.memory_space<smem>>
    %179 = vector.broadcast %178 : f32 to vector<8x128xf32>
    %180 = arith.mulf %179, %6 : vector<8x128xf32>
    %181 = arith.addf %177, %180 : vector<8x128xf32>
    %c23 = arith.constant 23 : index
    %182 = memref.load %arg5[%c23] : memref<56xf32, #tpu.memory_space<smem>>
    %c127_i32_46 = arith.constant 127 : i32
    %183 = tpu.dynamic_rotate %6 by %c127_i32_46 dim 1 : vector<8x128xf32>, i32 -> vector<8x128xf32>
    %184 = arith.mulf %23, %183 : vector<8x128xf32>
    %185 = vector.broadcast %182 : f32 to vector<8x128xf32>
    %186 = arith.mulf %185, %184 : vector<8x128xf32>
    %187 = arith.addf %181, %186 : vector<8x128xf32>
    %c96_i32_47 = arith.constant 96 : i32
    %188 = tpu.dynamic_rotate %6 by %c96_i32_47 dim 1 : vector<8x128xf32>, i32 -> vector<8x128xf32>
    %189 = arith.mulf %27, %188 : vector<8x128xf32>
    %c7_i32_48 = arith.constant 7 : i32
    %190 = tpu.dynamic_rotate %188 by %c7_i32_48 dim 0 : vector<8x128xf32>, i32 -> vector<8x128xf32>
    %191 = arith.mulf %29, %190 : vector<8x128xf32>
    %192 = arith.addf %189, %191 : vector<8x128xf32>
    %c24 = arith.constant 24 : index
    %193 = memref.load %arg5[%c24] : memref<56xf32, #tpu.memory_space<smem>>
    %c1_i32_49 = arith.constant 1 : i32
    %194 = tpu.dynamic_rotate %192 by %c1_i32_49 dim 1 : vector<8x128xf32>, i32 -> vector<8x128xf32>
    %195 = arith.mulf %25, %194 : vector<8x128xf32>
    %196 = vector.broadcast %193 : f32 to vector<8x128xf32>
    %197 = arith.mulf %196, %195 : vector<8x128xf32>
    %198 = arith.addf %187, %197 : vector<8x128xf32>
    %c25 = arith.constant 25 : index
    %199 = memref.load %arg5[%c25] : memref<56xf32, #tpu.memory_space<smem>>
    %200 = vector.broadcast %199 : f32 to vector<8x128xf32>
    %201 = arith.mulf %200, %192 : vector<8x128xf32>
    %202 = arith.addf %198, %201 : vector<8x128xf32>
    %c26 = arith.constant 26 : index
    %203 = memref.load %arg5[%c26] : memref<56xf32, #tpu.memory_space<smem>>
    %c127_i32_50 = arith.constant 127 : i32
    %204 = tpu.dynamic_rotate %192 by %c127_i32_50 dim 1 : vector<8x128xf32>, i32 -> vector<8x128xf32>
    %205 = arith.mulf %23, %204 : vector<8x128xf32>
    %206 = vector.broadcast %203 : f32 to vector<8x128xf32>
    %207 = arith.mulf %206, %205 : vector<8x128xf32>
    %208 = arith.addf %202, %207 : vector<8x128xf32>
    %209 = arith.addf %151, %208 : vector<8x128xf32>
    %c1_51 = arith.constant 1 : index
    %c0_52 = arith.constant 0 : index
    %c0_53 = arith.constant 0 : index
    %210 = vector.load %arg3[%c1_51, %c0_52, %c0_53] : memref<2x8x128xf32, #tpu.memory_space<vmem>>, vector<1x8x128xf32>
    %211 = vector.shape_cast %210 : vector<1x8x128xf32> to vector<8x128xf32>
    %c32_i32_54 = arith.constant 32 : i32
    %212 = tpu.dynamic_rotate %5 by %c32_i32_54 dim 1 : vector<8x128xf32>, i32 -> vector<8x128xf32>
    %213 = arith.mulf %31, %212 : vector<8x128xf32>
    %c1_i32_55 = arith.constant 1 : i32
    %214 = tpu.dynamic_rotate %212 by %c1_i32_55 dim 0 : vector<8x128xf32>, i32 -> vector<8x128xf32>
    %215 = arith.mulf %33, %214 : vector<8x128xf32>
    %216 = arith.addf %213, %215 : vector<8x128xf32>
    %c27 = arith.constant 27 : index
    %217 = memref.load %arg5[%c27] : memref<56xf32, #tpu.memory_space<smem>>
    %c1_i32_56 = arith.constant 1 : i32
    %218 = tpu.dynamic_rotate %216 by %c1_i32_56 dim 1 : vector<8x128xf32>, i32 -> vector<8x128xf32>
    %219 = arith.mulf %25, %218 : vector<8x128xf32>
    %220 = vector.broadcast %217 : f32 to vector<8x128xf32>
    %221 = arith.mulf %220, %219 : vector<8x128xf32>
    %c28 = arith.constant 28 : index
    %222 = memref.load %arg5[%c28] : memref<56xf32, #tpu.memory_space<smem>>
    %223 = vector.broadcast %222 : f32 to vector<8x128xf32>
    %224 = arith.mulf %223, %216 : vector<8x128xf32>
    %225 = arith.addf %221, %224 : vector<8x128xf32>
    %c29 = arith.constant 29 : index
    %226 = memref.load %arg5[%c29] : memref<56xf32, #tpu.memory_space<smem>>
    %c127_i32_57 = arith.constant 127 : i32
    %227 = tpu.dynamic_rotate %216 by %c127_i32_57 dim 1 : vector<8x128xf32>, i32 -> vector<8x128xf32>
    %228 = arith.mulf %23, %227 : vector<8x128xf32>
    %229 = vector.broadcast %226 : f32 to vector<8x128xf32>
    %230 = arith.mulf %229, %228 : vector<8x128xf32>
    %231 = arith.addf %225, %230 : vector<8x128xf32>
    %c30 = arith.constant 30 : index
    %232 = memref.load %arg5[%c30] : memref<56xf32, #tpu.memory_space<smem>>
    %c1_i32_58 = arith.constant 1 : i32
    %233 = tpu.dynamic_rotate %5 by %c1_i32_58 dim 1 : vector<8x128xf32>, i32 -> vector<8x128xf32>
    %234 = arith.mulf %25, %233 : vector<8x128xf32>
    %235 = vector.broadcast %232 : f32 to vector<8x128xf32>
    %236 = arith.mulf %235, %234 : vector<8x128xf32>
    %237 = arith.addf %231, %236 : vector<8x128xf32>
    %c31 = arith.constant 31 : index
    %238 = memref.load %arg5[%c31] : memref<56xf32, #tpu.memory_space<smem>>
    %239 = vector.broadcast %238 : f32 to vector<8x128xf32>
    %240 = arith.mulf %239, %5 : vector<8x128xf32>
    %241 = arith.addf %237, %240 : vector<8x128xf32>
    %c32 = arith.constant 32 : index
    %242 = memref.load %arg5[%c32] : memref<56xf32, #tpu.memory_space<smem>>
    %c127_i32_59 = arith.constant 127 : i32
    %243 = tpu.dynamic_rotate %5 by %c127_i32_59 dim 1 : vector<8x128xf32>, i32 -> vector<8x128xf32>
    %244 = arith.mulf %23, %243 : vector<8x128xf32>
    %245 = vector.broadcast %242 : f32 to vector<8x128xf32>
    %246 = arith.mulf %245, %244 : vector<8x128xf32>
    %247 = arith.addf %241, %246 : vector<8x128xf32>
    %c96_i32_60 = arith.constant 96 : i32
    %248 = tpu.dynamic_rotate %5 by %c96_i32_60 dim 1 : vector<8x128xf32>, i32 -> vector<8x128xf32>
    %249 = arith.mulf %27, %248 : vector<8x128xf32>
    %c7_i32_61 = arith.constant 7 : i32
    %250 = tpu.dynamic_rotate %248 by %c7_i32_61 dim 0 : vector<8x128xf32>, i32 -> vector<8x128xf32>
    %251 = arith.mulf %29, %250 : vector<8x128xf32>
    %252 = arith.addf %249, %251 : vector<8x128xf32>
    %c33 = arith.constant 33 : index
    %253 = memref.load %arg5[%c33] : memref<56xf32, #tpu.memory_space<smem>>
    %c1_i32_62 = arith.constant 1 : i32
    %254 = tpu.dynamic_rotate %252 by %c1_i32_62 dim 1 : vector<8x128xf32>, i32 -> vector<8x128xf32>
    %255 = arith.mulf %25, %254 : vector<8x128xf32>
    %256 = vector.broadcast %253 : f32 to vector<8x128xf32>
    %257 = arith.mulf %256, %255 : vector<8x128xf32>
    %258 = arith.addf %247, %257 : vector<8x128xf32>
    %c34 = arith.constant 34 : index
    %259 = memref.load %arg5[%c34] : memref<56xf32, #tpu.memory_space<smem>>
    %260 = vector.broadcast %259 : f32 to vector<8x128xf32>
    %261 = arith.mulf %260, %252 : vector<8x128xf32>
    %262 = arith.addf %258, %261 : vector<8x128xf32>
    %c35 = arith.constant 35 : index
    %263 = memref.load %arg5[%c35] : memref<56xf32, #tpu.memory_space<smem>>
    %c127_i32_63 = arith.constant 127 : i32
    %264 = tpu.dynamic_rotate %252 by %c127_i32_63 dim 1 : vector<8x128xf32>, i32 -> vector<8x128xf32>
    %265 = arith.mulf %23, %264 : vector<8x128xf32>
    %266 = vector.broadcast %263 : f32 to vector<8x128xf32>
    %267 = arith.mulf %266, %265 : vector<8x128xf32>
    %268 = arith.addf %262, %267 : vector<8x128xf32>
    %269 = arith.addf %211, %268 : vector<8x128xf32>
    %c32_i32_64 = arith.constant 32 : i32
    %270 = tpu.dynamic_rotate %21 by %c32_i32_64 dim 1 : vector<8x128xf32>, i32 -> vector<8x128xf32>
    %271 = arith.mulf %31, %270 : vector<8x128xf32>
    %c1_i32_65 = arith.constant 1 : i32
    %272 = tpu.dynamic_rotate %270 by %c1_i32_65 dim 0 : vector<8x128xf32>, i32 -> vector<8x128xf32>
    %273 = arith.mulf %33, %272 : vector<8x128xf32>
    %274 = arith.addf %271, %273 : vector<8x128xf32>
    %c36 = arith.constant 36 : index
    %275 = memref.load %arg5[%c36] : memref<56xf32, #tpu.memory_space<smem>>
    %c1_i32_66 = arith.constant 1 : i32
    %276 = tpu.dynamic_rotate %274 by %c1_i32_66 dim 1 : vector<8x128xf32>, i32 -> vector<8x128xf32>
    %277 = arith.mulf %25, %276 : vector<8x128xf32>
    %278 = vector.broadcast %275 : f32 to vector<8x128xf32>
    %279 = arith.mulf %278, %277 : vector<8x128xf32>
    %c37 = arith.constant 37 : index
    %280 = memref.load %arg5[%c37] : memref<56xf32, #tpu.memory_space<smem>>
    %281 = vector.broadcast %280 : f32 to vector<8x128xf32>
    %282 = arith.mulf %281, %274 : vector<8x128xf32>
    %283 = arith.addf %279, %282 : vector<8x128xf32>
    %c38 = arith.constant 38 : index
    %284 = memref.load %arg5[%c38] : memref<56xf32, #tpu.memory_space<smem>>
    %c127_i32_67 = arith.constant 127 : i32
    %285 = tpu.dynamic_rotate %274 by %c127_i32_67 dim 1 : vector<8x128xf32>, i32 -> vector<8x128xf32>
    %286 = arith.mulf %23, %285 : vector<8x128xf32>
    %287 = vector.broadcast %284 : f32 to vector<8x128xf32>
    %288 = arith.mulf %287, %286 : vector<8x128xf32>
    %289 = arith.addf %283, %288 : vector<8x128xf32>
    %c39 = arith.constant 39 : index
    %290 = memref.load %arg5[%c39] : memref<56xf32, #tpu.memory_space<smem>>
    %c1_i32_68 = arith.constant 1 : i32
    %291 = tpu.dynamic_rotate %21 by %c1_i32_68 dim 1 : vector<8x128xf32>, i32 -> vector<8x128xf32>
    %292 = arith.mulf %25, %291 : vector<8x128xf32>
    %293 = vector.broadcast %290 : f32 to vector<8x128xf32>
    %294 = arith.mulf %293, %292 : vector<8x128xf32>
    %295 = arith.addf %289, %294 : vector<8x128xf32>
    %c40 = arith.constant 40 : index
    %296 = memref.load %arg5[%c40] : memref<56xf32, #tpu.memory_space<smem>>
    %297 = vector.broadcast %296 : f32 to vector<8x128xf32>
    %298 = arith.mulf %297, %21 : vector<8x128xf32>
    %299 = arith.addf %295, %298 : vector<8x128xf32>
    %c41 = arith.constant 41 : index
    %300 = memref.load %arg5[%c41] : memref<56xf32, #tpu.memory_space<smem>>
    %c127_i32_69 = arith.constant 127 : i32
    %301 = tpu.dynamic_rotate %21 by %c127_i32_69 dim 1 : vector<8x128xf32>, i32 -> vector<8x128xf32>
    %302 = arith.mulf %23, %301 : vector<8x128xf32>
    %303 = vector.broadcast %300 : f32 to vector<8x128xf32>
    %304 = arith.mulf %303, %302 : vector<8x128xf32>
    %305 = arith.addf %299, %304 : vector<8x128xf32>
    %c96_i32_70 = arith.constant 96 : i32
    %306 = tpu.dynamic_rotate %21 by %c96_i32_70 dim 1 : vector<8x128xf32>, i32 -> vector<8x128xf32>
    %307 = arith.mulf %27, %306 : vector<8x128xf32>
    %c7_i32_71 = arith.constant 7 : i32
    %308 = tpu.dynamic_rotate %306 by %c7_i32_71 dim 0 : vector<8x128xf32>, i32 -> vector<8x128xf32>
    %309 = arith.mulf %29, %308 : vector<8x128xf32>
    %310 = arith.addf %307, %309 : vector<8x128xf32>
    %c42 = arith.constant 42 : index
    %311 = memref.load %arg5[%c42] : memref<56xf32, #tpu.memory_space<smem>>
    %c1_i32_72 = arith.constant 1 : i32
    %312 = tpu.dynamic_rotate %310 by %c1_i32_72 dim 1 : vector<8x128xf32>, i32 -> vector<8x128xf32>
    %313 = arith.mulf %25, %312 : vector<8x128xf32>
    %314 = vector.broadcast %311 : f32 to vector<8x128xf32>
    %315 = arith.mulf %314, %313 : vector<8x128xf32>
    %316 = arith.addf %305, %315 : vector<8x128xf32>
    %c43 = arith.constant 43 : index
    %317 = memref.load %arg5[%c43] : memref<56xf32, #tpu.memory_space<smem>>
    %318 = vector.broadcast %317 : f32 to vector<8x128xf32>
    %319 = arith.mulf %318, %310 : vector<8x128xf32>
    %320 = arith.addf %316, %319 : vector<8x128xf32>
    %c44 = arith.constant 44 : index
    %321 = memref.load %arg5[%c44] : memref<56xf32, #tpu.memory_space<smem>>
    %c127_i32_73 = arith.constant 127 : i32
    %322 = tpu.dynamic_rotate %310 by %c127_i32_73 dim 1 : vector<8x128xf32>, i32 -> vector<8x128xf32>
    %323 = arith.mulf %23, %322 : vector<8x128xf32>
    %324 = vector.broadcast %321 : f32 to vector<8x128xf32>
    %325 = arith.mulf %324, %323 : vector<8x128xf32>
    %326 = arith.addf %320, %325 : vector<8x128xf32>
    %327 = arith.addf %269, %326 : vector<8x128xf32>
    %c32_i32_74 = arith.constant 32 : i32
    %328 = tpu.dynamic_rotate %7 by %c32_i32_74 dim 1 : vector<8x128xf32>, i32 -> vector<8x128xf32>
    %329 = arith.mulf %31, %328 : vector<8x128xf32>
    %c1_i32_75 = arith.constant 1 : i32
    %330 = tpu.dynamic_rotate %328 by %c1_i32_75 dim 0 : vector<8x128xf32>, i32 -> vector<8x128xf32>
    %331 = arith.mulf %33, %330 : vector<8x128xf32>
    %332 = arith.addf %329, %331 : vector<8x128xf32>
    %c45 = arith.constant 45 : index
    %333 = memref.load %arg5[%c45] : memref<56xf32, #tpu.memory_space<smem>>
    %c1_i32_76 = arith.constant 1 : i32
    %334 = tpu.dynamic_rotate %332 by %c1_i32_76 dim 1 : vector<8x128xf32>, i32 -> vector<8x128xf32>
    %335 = arith.mulf %25, %334 : vector<8x128xf32>
    %336 = vector.broadcast %333 : f32 to vector<8x128xf32>
    %337 = arith.mulf %336, %335 : vector<8x128xf32>
    %c46 = arith.constant 46 : index
    %338 = memref.load %arg5[%c46] : memref<56xf32, #tpu.memory_space<smem>>
    %339 = vector.broadcast %338 : f32 to vector<8x128xf32>
    %340 = arith.mulf %339, %332 : vector<8x128xf32>
    %341 = arith.addf %337, %340 : vector<8x128xf32>
    %c47 = arith.constant 47 : index
    %342 = memref.load %arg5[%c47] : memref<56xf32, #tpu.memory_space<smem>>
    %c127_i32_77 = arith.constant 127 : i32
    %343 = tpu.dynamic_rotate %332 by %c127_i32_77 dim 1 : vector<8x128xf32>, i32 -> vector<8x128xf32>
    %344 = arith.mulf %23, %343 : vector<8x128xf32>
    %345 = vector.broadcast %342 : f32 to vector<8x128xf32>
    %346 = arith.mulf %345, %344 : vector<8x128xf32>
    %347 = arith.addf %341, %346 : vector<8x128xf32>
    %c48 = arith.constant 48 : index
    %348 = memref.load %arg5[%c48] : memref<56xf32, #tpu.memory_space<smem>>
    %c1_i32_78 = arith.constant 1 : i32
    %349 = tpu.dynamic_rotate %7 by %c1_i32_78 dim 1 : vector<8x128xf32>, i32 -> vector<8x128xf32>
    %350 = arith.mulf %25, %349 : vector<8x128xf32>
    %351 = vector.broadcast %348 : f32 to vector<8x128xf32>
    %352 = arith.mulf %351, %350 : vector<8x128xf32>
    %353 = arith.addf %347, %352 : vector<8x128xf32>
    %c49 = arith.constant 49 : index
    %354 = memref.load %arg5[%c49] : memref<56xf32, #tpu.memory_space<smem>>
    %355 = vector.broadcast %354 : f32 to vector<8x128xf32>
    %356 = arith.mulf %355, %7 : vector<8x128xf32>
    %357 = arith.addf %353, %356 : vector<8x128xf32>
    %c50 = arith.constant 50 : index
    %358 = memref.load %arg5[%c50] : memref<56xf32, #tpu.memory_space<smem>>
    %c127_i32_79 = arith.constant 127 : i32
    %359 = tpu.dynamic_rotate %7 by %c127_i32_79 dim 1 : vector<8x128xf32>, i32 -> vector<8x128xf32>
    %360 = arith.mulf %23, %359 : vector<8x128xf32>
    %361 = vector.broadcast %358 : f32 to vector<8x128xf32>
    %362 = arith.mulf %361, %360 : vector<8x128xf32>
    %363 = arith.addf %357, %362 : vector<8x128xf32>
    %c96_i32_80 = arith.constant 96 : i32
    %364 = tpu.dynamic_rotate %7 by %c96_i32_80 dim 1 : vector<8x128xf32>, i32 -> vector<8x128xf32>
    %365 = arith.mulf %27, %364 : vector<8x128xf32>
    %c7_i32_81 = arith.constant 7 : i32
    %366 = tpu.dynamic_rotate %364 by %c7_i32_81 dim 0 : vector<8x128xf32>, i32 -> vector<8x128xf32>
    %367 = arith.mulf %29, %366 : vector<8x128xf32>
    %368 = arith.addf %365, %367 : vector<8x128xf32>
    %c51 = arith.constant 51 : index
    %369 = memref.load %arg5[%c51] : memref<56xf32, #tpu.memory_space<smem>>
    %c1_i32_82 = arith.constant 1 : i32
    %370 = tpu.dynamic_rotate %368 by %c1_i32_82 dim 1 : vector<8x128xf32>, i32 -> vector<8x128xf32>
    %371 = arith.mulf %25, %370 : vector<8x128xf32>
    %372 = vector.broadcast %369 : f32 to vector<8x128xf32>
    %373 = arith.mulf %372, %371 : vector<8x128xf32>
    %374 = arith.addf %363, %373 : vector<8x128xf32>
    %c52 = arith.constant 52 : index
    %375 = memref.load %arg5[%c52] : memref<56xf32, #tpu.memory_space<smem>>
    %376 = vector.broadcast %375 : f32 to vector<8x128xf32>
    %377 = arith.mulf %376, %368 : vector<8x128xf32>
    %378 = arith.addf %374, %377 : vector<8x128xf32>
    %c53 = arith.constant 53 : index
    %379 = memref.load %arg5[%c53] : memref<56xf32, #tpu.memory_space<smem>>
    %c127_i32_83 = arith.constant 127 : i32
    %380 = tpu.dynamic_rotate %368 by %c127_i32_83 dim 1 : vector<8x128xf32>, i32 -> vector<8x128xf32>
    %381 = arith.mulf %23, %380 : vector<8x128xf32>
    %382 = vector.broadcast %379 : f32 to vector<8x128xf32>
    %383 = arith.mulf %382, %381 : vector<8x128xf32>
    %384 = arith.addf %378, %383 : vector<8x128xf32>
    %385 = arith.addf %327, %384 : vector<8x128xf32>
    %c54 = arith.constant 54 : index
    %386 = memref.load %arg5[%c54] : memref<56xf32, #tpu.memory_space<smem>>
    %c55 = arith.constant 55 : index
    %387 = memref.load %arg5[%c55] : memref<56xf32, #tpu.memory_space<smem>>
    %cst_84 = arith.constant 5.000000e-01 : f32
    %388 = vector.broadcast %cst_84 : f32 to vector<8x128xf32>
    %389 = arith.mulf %388, %209 : vector<8x128xf32>
    %390 = math.tanh %389 : vector<8x128xf32>
    %cst_85 = arith.constant 5.000000e-01 : f32
    %391 = vector.broadcast %cst_85 : f32 to vector<8x128xf32>
    %392 = arith.mulf %391, %390 : vector<8x128xf32>
    %cst_86 = arith.constant 5.000000e-01 : f32
    %393 = vector.broadcast %cst_86 : f32 to vector<8x128xf32>
    %394 = arith.addf %392, %393 : vector<8x128xf32>
    %395 = vector.broadcast %386 : f32 to vector<8x128xf32>
    %396 = arith.mulf %395, %394 : vector<8x128xf32>
    %cst_87 = arith.constant 1.000000e+00 : f32
    %397 = vector.broadcast %cst_87 : f32 to vector<8x128xf32>
    %398 = arith.addf %397, %396 : vector<8x128xf32>
    %cst_88 = arith.constant 5.000000e-01 : f32
    %399 = vector.broadcast %cst_88 : f32 to vector<8x128xf32>
    %400 = arith.mulf %399, %385 : vector<8x128xf32>
    %401 = math.tanh %400 : vector<8x128xf32>
    %cst_89 = arith.constant 5.000000e-01 : f32
    %402 = vector.broadcast %cst_89 : f32 to vector<8x128xf32>
    %403 = arith.mulf %402, %401 : vector<8x128xf32>
    %cst_90 = arith.constant 5.000000e-01 : f32
    %404 = vector.broadcast %cst_90 : f32 to vector<8x128xf32>
    %405 = arith.addf %403, %404 : vector<8x128xf32>
    %406 = vector.broadcast %387 : f32 to vector<8x128xf32>
    %407 = arith.mulf %406, %405 : vector<8x128xf32>
    %cst_91 = arith.constant 1.000000e+00 : f32
    %408 = vector.broadcast %cst_91 : f32 to vector<8x128xf32>
    %409 = arith.addf %408, %407 : vector<8x128xf32>
    %410 = vector.extract_strided_slice %3 {offsets = [0, 0], sizes = [8, 128], strides = [1, 1]} : vector<96x128xf32> to vector<8x128xf32>
    %411 = arith.mulf %410, %398 : vector<8x128xf32>
    %c0_92 = arith.constant 0 : index
    %c0_93 = arith.constant 0 : index
    %c0_94 = arith.constant 0 : index
    %c0_95 = arith.constant 0 : index
    %412 = vector.load %arg6[%c0_92, %c0_93, %c0_94, %c0_95] : memref<1x8x8x128xf32, #tpu.memory_space<vmem>>, vector<1x1x8x128xf32>
    %413 = vector.shape_cast %412 : vector<1x1x8x128xf32> to vector<8x128xf32>
    %414 = vector.shape_cast %411 : vector<8x128xf32> to vector<1x1x8x128xf32>
    tpu.vector_store %arg6[%c0_92, %c0_93, %c0_94, %c0_95], %414 {strides = array<i32>} : memref<1x8x8x128xf32, #tpu.memory_space<vmem>>, vector<1x1x8x128xf32>,
    %415 = vector.extract_strided_slice %3 {offsets = [32, 0], sizes = [8, 128], strides = [1, 1]} : vector<96x128xf32> to vector<8x128xf32>
    %416 = arith.mulf %415, %409 : vector<8x128xf32>
    %c0_96 = arith.constant 0 : index
    %c4_97 = arith.constant 4 : index
    %c0_98 = arith.constant 0 : index
    %c0_99 = arith.constant 0 : index
    %417 = vector.load %arg6[%c0_96, %c4_97, %c0_98, %c0_99] : memref<1x8x8x128xf32, #tpu.memory_space<vmem>>, vector<1x1x8x128xf32>
    %418 = vector.shape_cast %417 : vector<1x1x8x128xf32> to vector<8x128xf32>
    %419 = vector.shape_cast %416 : vector<8x128xf32> to vector<1x1x8x128xf32>
    tpu.vector_store %arg6[%c0_96, %c4_97, %c0_98, %c0_99], %419 {strides = array<i32>} : memref<1x8x8x128xf32, #tpu.memory_space<vmem>>, vector<1x1x8x128xf32>,
    %420 = vector.extract_strided_slice %3 {offsets = [8, 0], sizes = [8, 128], strides = [1, 1]} : vector<96x128xf32> to vector<8x128xf32>
    %421 = arith.mulf %420, %398 : vector<8x128xf32>
    %c0_100 = arith.constant 0 : index
    %c1_101 = arith.constant 1 : index
    %c0_102 = arith.constant 0 : index
    %c0_103 = arith.constant 0 : index
    %422 = vector.load %arg6[%c0_100, %c1_101, %c0_102, %c0_103] : memref<1x8x8x128xf32, #tpu.memory_space<vmem>>, vector<1x1x8x128xf32>
    %423 = vector.shape_cast %422 : vector<1x1x8x128xf32> to vector<8x128xf32>
    %424 = vector.shape_cast %421 : vector<8x128xf32> to vector<1x1x8x128xf32>
    tpu.vector_store %arg6[%c0_100, %c1_101, %c0_102, %c0_103], %424 {strides = array<i32>} : memref<1x8x8x128xf32, #tpu.memory_space<vmem>>, vector<1x1x8x128xf32>,
    %425 = vector.extract_strided_slice %3 {offsets = [40, 0], sizes = [8, 128], strides = [1, 1]} : vector<96x128xf32> to vector<8x128xf32>
    %426 = arith.mulf %425, %409 : vector<8x128xf32>
    %c0_104 = arith.constant 0 : index
    %c5_105 = arith.constant 5 : index
    %c0_106 = arith.constant 0 : index
    %c0_107 = arith.constant 0 : index
    %427 = vector.load %arg6[%c0_104, %c5_105, %c0_106, %c0_107] : memref<1x8x8x128xf32, #tpu.memory_space<vmem>>, vector<1x1x8x128xf32>
    %428 = vector.shape_cast %427 : vector<1x1x8x128xf32> to vector<8x128xf32>
    %429 = vector.shape_cast %426 : vector<8x128xf32> to vector<1x1x8x128xf32>
    tpu.vector_store %arg6[%c0_104, %c5_105, %c0_106, %c0_107], %429 {strides = array<i32>} : memref<1x8x8x128xf32, #tpu.memory_space<vmem>>, vector<1x1x8x128xf32>,
    %430 = vector.extract_strided_slice %3 {offsets = [16, 0], sizes = [8, 128], strides = [1, 1]} : vector<96x128xf32> to vector<8x128xf32>
    %431 = arith.mulf %430, %398 : vector<8x128xf32>
    %c0_108 = arith.constant 0 : index
    %c2_109 = arith.constant 2 : index
    %c0_110 = arith.constant 0 : index
    %c0_111 = arith.constant 0 : index
    %432 = vector.load %arg6[%c0_108, %c2_109, %c0_110, %c0_111] : memref<1x8x8x128xf32, #tpu.memory_space<vmem>>, vector<1x1x8x128xf32>
    %433 = vector.shape_cast %432 : vector<1x1x8x128xf32> to vector<8x128xf32>
    %434 = vector.shape_cast %431 : vector<8x128xf32> to vector<1x1x8x128xf32>
    tpu.vector_store %arg6[%c0_108, %c2_109, %c0_110, %c0_111], %434 {strides = array<i32>} : memref<1x8x8x128xf32, #tpu.memory_space<vmem>>, vector<1x1x8x128xf32>,
    %435 = vector.extract_strided_slice %3 {offsets = [48, 0], sizes = [8, 128], strides = [1, 1]} : vector<96x128xf32> to vector<8x128xf32>
    %436 = arith.mulf %435, %409 : vector<8x128xf32>
    %c0_112 = arith.constant 0 : index
    %c6_113 = arith.constant 6 : index
    %c0_114 = arith.constant 0 : index
    %c0_115 = arith.constant 0 : index
    %437 = vector.load %arg6[%c0_112, %c6_113, %c0_114, %c0_115] : memref<1x8x8x128xf32, #tpu.memory_space<vmem>>, vector<1x1x8x128xf32>
    %438 = vector.shape_cast %437 : vector<1x1x8x128xf32> to vector<8x128xf32>
    %439 = vector.shape_cast %436 : vector<8x128xf32> to vector<1x1x8x128xf32>
    tpu.vector_store %arg6[%c0_112, %c6_113, %c0_114, %c0_115], %439 {strides = array<i32>} : memref<1x8x8x128xf32, #tpu.memory_space<vmem>>, vector<1x1x8x128xf32>,
    %440 = vector.extract_strided_slice %3 {offsets = [24, 0], sizes = [8, 128], strides = [1, 1]} : vector<96x128xf32> to vector<8x128xf32>
    %441 = arith.mulf %440, %398 : vector<8x128xf32>
    %c0_116 = arith.constant 0 : index
    %c3_117 = arith.constant 3 : index
    %c0_118 = arith.constant 0 : index
    %c0_119 = arith.constant 0 : index
    %442 = vector.load %arg6[%c0_116, %c3_117, %c0_118, %c0_119] : memref<1x8x8x128xf32, #tpu.memory_space<vmem>>, vector<1x1x8x128xf32>
    %443 = vector.shape_cast %442 : vector<1x1x8x128xf32> to vector<8x128xf32>
    %444 = vector.shape_cast %441 : vector<8x128xf32> to vector<1x1x8x128xf32>
    tpu.vector_store %arg6[%c0_116, %c3_117, %c0_118, %c0_119], %444 {strides = array<i32>} : memref<1x8x8x128xf32, #tpu.memory_space<vmem>>, vector<1x1x8x128xf32>,
    %445 = vector.extract_strided_slice %3 {offsets = [56, 0], sizes = [8, 128], strides = [1, 1]} : vector<96x128xf32> to vector<8x128xf32>
    %446 = arith.mulf %445, %409 : vector<8x128xf32>
    %c0_120 = arith.constant 0 : index
    %c7_121 = arith.constant 7 : index
    %c0_122 = arith.constant 0 : index
    %c0_123 = arith.constant 0 : index
    %447 = vector.load %arg6[%c0_120, %c7_121, %c0_122, %c0_123] : memref<1x8x8x128xf32, #tpu.memory_space<vmem>>, vector<1x1x8x128xf32>
    %448 = vector.shape_cast %447 : vector<1x1x8x128xf32> to vector<8x128xf32>
    %449 = vector.shape_cast %446 : vector<8x128xf32> to vector<1x1x8x128xf32>
    tpu.vector_store %arg6[%c0_120, %c7_121, %c0_122, %c0_123], %449 {strides = array<i32>} : memref<1x8x8x128xf32, #tpu.memory_space<vmem>>, vector<1x1x8x128xf32>,
    return
  }
  func.func @transform_0(%arg0: i32) -> (i32, i32, i32) {
    %c0_i32 = arith.constant 0 : i32
    %c0_i32_0 = arith.constant 0 : i32
    %c0_i32_1 = arith.constant 0 : i32
    return %arg0, %c0_i32, %c0_i32_0 : i32, i32, i32
  }
  func.func @transform_1(%arg0: i32) -> (i32, i32) {
    %c0_i32 = arith.constant 0 : i32
    %c0_i32_0 = arith.constant 0 : i32
    %c0_i32_1 = arith.constant 0 : i32
    return %c0_i32, %c0_i32_0 : i32, i32
  }
  func.func @transform_2(%arg0: i32) -> (i32, i32, i32) {
    %c0_i32 = arith.constant 0 : i32
    %c0_i32_0 = arith.constant 0 : i32
    %c0_i32_1 = arith.constant 0 : i32
    %c0_i32_2 = arith.constant 0 : i32
    return %c0_i32, %c0_i32_0, %c0_i32_1 : i32, i32, i32
  }
  func.func @transform_3(%arg0: i32) -> (i32, i32, i32) {
    %c0_i32 = arith.constant 0 : i32
    %c0_i32_0 = arith.constant 0 : i32
    %c0_i32_1 = arith.constant 0 : i32
    %c0_i32_2 = arith.constant 0 : i32
    return %c0_i32, %c0_i32_0, %c0_i32_1 : i32, i32, i32
  }
  func.func @transform_4(%arg0: i32) -> i32 {
    %c0_i32 = arith.constant 0 : i32
    %c0_i32_0 = arith.constant 0 : i32
    return %c0_i32 : i32
  }
  func.func @transform_5(%arg0: i32) -> (i32, i32, i32, i32) {
    %c0_i32 = arith.constant 0 : i32
    %c0_i32_0 = arith.constant 0 : i32
    %c0_i32_1 = arith.constant 0 : i32
    %c0_i32_2 = arith.constant 0 : i32
    return %arg0, %c0_i32, %c0_i32_0, %c0_i32_1 : i32, i32, i32, i32
  }
}

</mosaic_0001>

<llo_original>
// kernel: forward.1
$region0: #{forward.1}
  #allocation0 [shape = 'u32[]', space=smem, size = 0x4, offset = 0x4, fixed_abs, tag = 'smem constant byte address 0x4 - core index']
  #allocation1 [shape = 'u32[72,128]{1,0:T(1,128)}', space=vmem, size = 0x9000, scoped, tag = 'internal scratch']
  %s0 = inlined_call_operand.vmem [shape: bf16[2,304,128], index: 0, kind: input, shape index: {}]
  %s1 = inlined_call_operand.vmem [shape: bf16[96,304], index: 1, kind: input, shape index: {}]
  %s2 = inlined_call_operand.vmem [shape: f32[2,8,128], index: 2, kind: input, shape index: {}]
  %s3 = inlined_call_operand.vmem [shape: f32[6,8,128], index: 3, kind: input, shape index: {}]
  %s4 = inlined_call_operand.vmem [shape: f32[56], index: 4, kind: input, shape index: {}]
  %s5 = inlined_call_operand.vmem [shape: f32[2,8,8,128], index: 5, kind: output, shape index: {}]
  %s6 = sld [smem:[#allocation0]]
  $region57: #{forward.1} parent=0
    _
  %s8 = ssub.s32 1, %s6
  %s9 = scalar_select 0, %s8, %s6
  $region1: #{forward.1} parent=0
    #allocation2 [shape = 'u8[512]{0}', space=smem, size = 0x200, scoped, tag = 'input window, operand 4, single buffered']
    #allocation3 [shape = 's32[2]{0}', space=sflag, size = 0x8, scoped, tag = 'scoped memory for forward.1']
    %10 = vsyncpa [#allocation3], 0
    loop: start=0, step=1, limit=4
    $region2: #{forward.1} parent=1 // loop_pre_header
      _
    $region3: #{forward.1} parent=1 // loop_header
      %s12 = sphi 0, %s16
      %p13 = scmp.ge.s32.totalorder %s12, 4
      %s22 = sphi 0, %s24
      %s25 = sphi 0, %s22
      %s26 = sphi 0, %s25
      %s42 = sphi 0, %s26
      %s46 = sphi 0, %s46
      %s48 = sphi 0, %s46
      %s49 = sphi 0, %s48
      %s63 = sphi 0, %s49
      %s67 = sphi 0, %s67
      %s69 = sphi 0, %s67
      %s70 = sphi 0, %s69
      %s84 = sphi 0, %s70
      %s88 = sphi 0, %s88
      %s90 = sphi 0, %s88
      %s91 = sphi 0, %s90
      %s105 = sphi 0, %s91
      %s109 = sphi 0, %s109
      %s111 = sphi 0, %s109
      %s112 = sphi 0, %s111
      %s126 = sphi 0, %s112
      %s132 = sphi 0, %s134
      %s135 = sphi 0, %s132
      %s136 = sphi 0, %s135
      %s152 = sphi 0, %s136
    $region4: #{forward.1} parent=1 // loop_header_branch
      %15 = sbr.rel (%p13) target = $region8
    $region5: #{forward.1} parent=1 // loop_body
      %s17 = ssub.s32 %s12, 1
      %s18 = ssub.s32 %s12, 2
      %s19 = sadd.s32 %s12, 1
      %s20 = ssub.s32 %s12, %s19
      %p21 = scmp.eq.s32.totalorder %s20, 0
      %s23 = sadd.s32 %s22, 1
      %s24 = scalar_select %p21, %s22, %s23
      %p27 = pneg %p21
      %p28 = scmp.eq.s32.totalorder %s12, 1
      %p29 = por %p27, %p28
      %p30 = scmp.ne.s32.totalorder %s22, %s25
      %p31 = scmp.eq.s32.totalorder %s12, 0
      %p32 = por %p30, %p31
      %p33 = scmp.ne.s32.totalorder %s22, %s25
      %p34 = scmp.eq.s32.totalorder %s17, 1
      %p35 = por %p33, %p34
      %p36 = scmp.ne.s32.totalorder %s25, %s26
      %p37 = scmp.eq.s32.totalorder %s17, 0
      %p38 = por %p36, %p37
      %p39 = scmp.ne.s32.totalorder %s25, %s26
      %p40 = scmp.eq.s32.totalorder %s18, 1
      %p41 = por %p39, %p40
      %p43 = scmp.ne.s32.totalorder %s26, %s42
      %p44 = scmp.eq.s32.totalorder %s18, 0
      %p45 = por %p43, %p44
      %s47 = sadd.s32 %s46, 1
      %p50 = scmp.eq.s32.totalorder %s12, 1
      %p51 = scmp.ne.s32.totalorder %s46, %s48
      %p52 = scmp.eq.s32.totalorder %s12, 0
      %p53 = por %p51, %p52
      %p54 = scmp.ne.s32.totalorder %s46, %s48
      %p55 = scmp.eq.s32.totalorder %s17, 1
      %p56 = por %p54, %p55
      %p57 = scmp.ne.s32.totalorder %s48, %s49
      %p58 = scmp.eq.s32.totalorder %s17, 0
      %p59 = por %p57, %p58
      %p60 = scmp.ne.s32.totalorder %s48, %s49
      %p61 = scmp.eq.s32.totalorder %s18, 1
      %p62 = por %p60, %p61
      %p64 = scmp.ne.s32.totalorder %s49, %s63
      %p65 = scmp.eq.s32.totalorder %s18, 0
      %p66 = por %p64, %p65
      %s68 = sadd.s32 %s67, 1
      %p71 = scmp.eq.s32.totalorder %s12, 1
      %p72 = scmp.ne.s32.totalorder %s67, %s69
      %p73 = scmp.eq.s32.totalorder %s12, 0
      %p74 = por %p72, %p73
      %p75 = scmp.ne.s32.totalorder %s67, %s69
      %p76 = scmp.eq.s32.totalorder %s17, 1
      %p77 = por %p75, %p76
      %p78 = scmp.ne.s32.totalorder %s69, %s70
      %p79 = scmp.eq.s32.totalorder %s17, 0
      %p80 = por %p78, %p79
      %p81 = scmp.ne.s32.totalorder %s69, %s70
      %p82 = scmp.eq.s32.totalorder %s18, 1
      %p83 = por %p81, %p82
      %p85 = scmp.ne.s32.totalorder %s70, %s84
      %p86 = scmp.eq.s32.totalorder %s18, 0
      %p87 = por %p85, %p86
      %s89 = sadd.s32 %s88, 1
      %p92 = scmp.eq.s32.totalorder %s12, 1
      %p93 = scmp.ne.s32.totalorder %s88, %s90
      %p94 = scmp.eq.s32.totalorder %s12, 0
      %p95 = por %p93, %p94
      %p96 = scmp.ne.s32.totalorder %s88, %s90
      %p97 = scmp.eq.s32.totalorder %s17, 1
      %p98 = por %p96, %p97
      %p99 = scmp.ne.s32.totalorder %s90, %s91
      %p100 = scmp.eq.s32.totalorder %s17, 0
      %p101 = por %p99, %p100
      %p102 = scmp.ne.s32.totalorder %s90, %s91
      %p103 = scmp.eq.s32.totalorder %s18, 1
      %p104 = por %p102, %p103
      %p106 = scmp.ne.s32.totalorder %s91, %s105
      %p107 = scmp.eq.s32.totalorder %s18, 0
      %p108 = por %p106, %p107
      %s110 = sadd.s32 %s109, 1
      %p113 = scmp.eq.s32.totalorder %s12, 1
      %p114 = scmp.ne.s32.totalorder %s109, %s111
      %p115 = scmp.eq.s32.totalorder %s12, 0
      %p116 = por %p114, %p115
      %p117 = scmp.ne.s32.totalorder %s109, %s111
      %p118 = scmp.eq.s32.totalorder %s17, 1
      %p119 = por %p117, %p118
      %p120 = scmp.ne.s32.totalorder %s111, %s112
      %p121 = scmp.eq.s32.totalorder %s17, 0
      %p122 = por %p120, %p121
      %p123 = scmp.ne.s32.totalorder %s111, %s112
      %p124 = scmp.eq.s32.totalorder %s18, 1
      %p125 = por %p123, %p124
      %p127 = scmp.ne.s32.totalorder %s112, %s126
      %p128 = scmp.eq.s32.totalorder %s18, 0
      %p129 = por %p127, %p128
      %s130 = ssub.s32 %s12, %s19
      %p131 = scmp.eq.s32.totalorder %s130, 0
      %s133 = sadd.s32 %s132, 1
      %s134 = scalar_select %p131, %s132, %s133
      %p137 = pneg %p131
      %p138 = scmp.eq.s32.totalorder %s12, 1
      %p139 = por %p137, %p138
      %p140 = scmp.ne.s32.totalorder %s132, %s135
      %p141 = scmp.eq.s32.totalorder %s12, 0
      %p142 = por %p140, %p141
      %p143 = scmp.ne.s32.totalorder %s132, %s135
      %p144 = scmp.eq.s32.totalorder %s17, 1
      %p145 = por %p143, %p144
      %p146 = scmp.ne.s32.totalorder %s135, %s136
      %p147 = scmp.eq.s32.totalorder %s17, 0
      %p148 = por %p146, %p147
      %p149 = scmp.ne.s32.totalorder %s135, %s136
      %p150 = scmp.eq.s32.totalorder %s18, 1
      %p151 = por %p149, %p150
      %p153 = scmp.ne.s32.totalorder %s136, %s152
      %p154 = scmp.eq.s32.totalorder %s18, 0
      %p155 = por %p153, %p154
      %p156 = scmp.le.s32.totalorder 1, %s12
      %p157 = scmp.lt.s32.totalorder %s12, 3
      %p158 = pnand %p156, %p157
      %p159 = pneg %p158
      // Predicated region
      $region9: #{forward.1} parent=5 // pred_check
        _
      $region10: #{forward.1} parent=5 // pred_check_branch
        %161 = sbr.rel (%p158) target = $region12
      $region11: #{forward.1} parent=5 // pred_region
        %s162 = ssub.s32 %s12, 1
        // Predicated region
        $region13: #{forward.1} parent=11 // pred_check
          %p163 = pneg %p59
        $region14: #{forward.1} parent=11 // pred_check_branch
          %165 = sbr.rel (%p163) target = $region16
        $region15: #{forward.1} parent=11 // pred_region
          _
        $region16: #{forward.1} parent=11 // pred_fallthru
          _
        // Predicated region
        $region17: #{forward.1} parent=11 // pred_check
          %p166 = pneg %p80
        $region18: #{forward.1} parent=11 // pred_check_branch
          %168 = sbr.rel (%p166) target = $region20
        $region19: #{forward.1} parent=11 // pred_region
          _
        $region20: #{forward.1} parent=11 // pred_fallthru
          _
        // Predicated region
        $region21: #{forward.1} parent=11 // pred_check
          %p169 = pneg %p101
        $region22: #{forward.1} parent=11 // pred_check_branch
          %171 = sbr.rel (%p169) target = $region24
        $region23: #{forward.1} parent=11 // pred_region
          _
        $region24: #{forward.1} parent=11 // pred_fallthru
          _
        // Predicated region
        $region25: #{forward.1} parent=11 // pred_check
          %p172 = pneg %p122
        $region26: #{forward.1} parent=11 // pred_check_branch
          %174 = sbr.rel (%p172) target = $region28
        $region27: #{forward.1} parent=11 // pred_region
          %176 = vsyncadd [#allocation3], 0
          %s178 = sshll.u32 %s4, 4
          %s179 = int_to_ptr.vmem [resolvable:$true] %s178
          %181 = dma.vmem_to_smem %s179, 16, [#allocation2], [#allocation3]
        $region28: #{forward.1} parent=11 // pred_fallthru
          _
      $region12: #{forward.1} parent=5 // pred_fallthru
        _
      %p182 = scmp.lt.s32.totalorder %s12, 2
      // Predicated region
      $region29: #{forward.1} parent=5 // pred_check
        %p183 = pneg %p182
      $region30: #{forward.1} parent=5 // pred_check_branch
        %185 = sbr.rel (%p183) target = $region32
      $region31: #{forward.1} parent=5 // pred_region
        // Predicated region
        $region33: #{forward.1} parent=31 // pred_check
          %p186 = pneg %p32
        $region34: #{forward.1} parent=31 // pred_check_branch
          %188 = sbr.rel (%p186) target = $region36
        $region35: #{forward.1} parent=31 // pred_region
          %p189 = scmp.lt.s32.totalorder %s12, 1
          %s190 = scalar_select %p189, %s12, 1
          %s191 = smul.addr %s190, 38
          %s192 = smul.addr %s191, 4
          %s193 = scalar_lea.vmem %s0, %s192
        $region36: #{forward.1} parent=31 // pred_fallthru
          _
      $region32: #{forward.1} parent=5 // pred_fallthru
        _
      %p194 = scmp.le.s32.totalorder 1, %s12
      %p195 = scmp.lt.s32.totalorder %s12, 3
      %p196 = pnand %p194, %p195
      %p197 = pneg %p196
      // Predicated region
      $region37: #{forward.1} parent=5 // pred_check
        _
      $region38: #{forward.1} parent=5 // pred_check_branch
        %199 = sbr.rel (%p196) target = $region40
      $region39: #{forward.1} parent=5 // pred_region
        %s200 = ssub.s32 %s12, 1
        // Predicated region
        $region41: #{forward.1} parent=39 // pred_check
          %p201 = pneg %p122
        $region42: #{forward.1} parent=39 // pred_check_branch
          %203 = sbr.rel (%p201) target = $region44
        $region43: #{forward.1} parent=39 // pred_region
          %205 = dma.done [#allocation3], 16
        $region44: #{forward.1} parent=39 // pred_fallthru
          _
        %206 = sfence
        %p207 = scmp.lt.s32.totalorder %s17, 1
        %s208 = scalar_select %p207, %s17, 1
        %s209 = smul.addr %s208, 38
        %s210 = smul.addr %s209, 4
        %s211 = scalar_lea.vmem %s0, %s210
        %p212 = pneg %p38
        %p213 = pneg %p35
        %p214 = pneg %p59
        %p215 = pneg %p56
        %p216 = pneg %p80
        %p217 = pneg %p77
        %p218 = pneg %p101
        %p219 = pneg %p98
        %p220 = pneg %p122
        %p221 = pneg %p119
        %p222 = pneg %p148
        %p223 = pneg %p145
        %p224 = scmp.lt.s32.totalorder %s17, 1
        %s225 = scalar_select %p224, %s17, 1
        %s226 = smul.addr %s225, 8
        %s227 = smul.addr %s226, 8
        %s228 = scalar_lea.vmem %s5, %s227
        %p229 = scmp.lt.s32.totalorder %s17, 1
        %s230 = scalar_select %p229, %s17, 1
        %s231 = smul.addr %s230, 38
        %s232 = smul.addr %s231, 4
        %s233 = scalar_lea.vmem %s0, %s232
        %p234 = scmp.lt.s32.totalorder %s17, 1
        %s235 = scalar_select %p234, %s17, 1
        %s236 = smul.addr %s235, 8
        %s237 = smul.addr %s236, 8
        %s238 = scalar_lea.vmem %s5, %s237
        %v240 = vld [vmem:[%s233] sm:$0xf]
        %v241 = vld [vmem:[%s233 + $0x4] sm:$0xf]
        %v242 = vld [vmem:[%s233 + $0x8] sm:$0xf]
        %v243 = vld [vmem:[%s233 + $0xc] sm:$0xf]
        %v244 = vld [vmem:[%s233 + $0x10] sm:$0xf]
        %v245 = vld [vmem:[%s233 + $0x14] sm:$0xf]
        %v246 = vld [vmem:[%s233 + $0x18] sm:$0xf]
        %v247 = vld [vmem:[%s233 + $0x1c] sm:$0xf]
        %v248 = vld [vmem:[%s233 + $0x20] sm:$0xf]
        %v249 = vld [vmem:[%s233 + $0x24] sm:$0xf]
        %v250 = vld [vmem:[%s233 + $0x28] sm:$0xf]
        %v251 = vld [vmem:[%s233 + $0x2c] sm:$0xf]
        %v252 = vld [vmem:[%s233 + $0x30] sm:$0xf]
        %v253 = vld [vmem:[%s233 + $0x34] sm:$0xf]
        %v254 = vld [vmem:[%s233 + $0x38] sm:$0xf]
        %v255 = vld [vmem:[%s233 + $0x3c] sm:$0xf]
        %v256 = vld [vmem:[%s233 + $0x40] sm:$0xf]
        %v257 = vld [vmem:[%s233 + $0x44] sm:$0xf]
        %v258 = vld [vmem:[%s233 + $0x48] sm:$0xf]
        %v259 = vld [vmem:[%s233 + $0x4c] sm:$0xf]
        %v260 = vld [vmem:[%s233 + $0x50] sm:$0xf]
        %v261 = vld [vmem:[%s233 + $0x54] sm:$0xf]
        %v262 = vld [vmem:[%s233 + $0x58] sm:$0xf]
        %v263 = vld [vmem:[%s233 + $0x5c] sm:$0xf]
        %v264 = vld [vmem:[%s233 + $0x60] sm:$0xf]
        %v265 = vld [vmem:[%s233 + $0x64] sm:$0xf]
        %v266 = vld [vmem:[%s233 + $0x68] sm:$0xf]
        %v267 = vld [vmem:[%s233 + $0x6c] sm:$0xf]
        %v268 = vld [vmem:[%s233 + $0x70] sm:$0xf]
        %v269 = vld [vmem:[%s233 + $0x74] sm:$0xf]
        %v270 = vld [vmem:[%s233 + $0x78] sm:$0xf]
        %v271 = vld [vmem:[%s233 + $0x7c] sm:$0xf]
        %v272 = vld [vmem:[%s233 + $0x80] sm:$0xf]
        %v273 = vld [vmem:[%s233 + $0x84] sm:$0xf]
        %v274 = vld [vmem:[%s233 + $0x88] sm:$0xf]
        %v275 = vld [vmem:[%s233 + $0x8c] sm:$0xf]
        %v276 = vld [vmem:[%s233 + $0x90] sm:$0xf]
        %v277 = vld [vmem:[%s233 + $0x94] sm:$0xf]
        %v278 = vld [vmem:[%s1] sm:$0xff]
        %v279 = vld [vmem:[%s1 + $0x8] sm:$0xf]
        %v280 = vld [vmem:[%s1 + $0xc] sm:$0xff]
        %v281 = vld [vmem:[%s1 + $0x14] sm:$0xf]
        %v282 = vld [vmem:[%s1 + $0x18] sm:$0xff]
        %v283 = vld [vmem:[%s1 + $0x20] sm:$0xf]
        %v284 = vld [vmem:[%s1 + $0x24] sm:$0xff]
        %v285 = vld [vmem:[%s1 + $0x2c] sm:$0xf]
        %v286 = vld [vmem:[%s1 + $0x30] sm:$0xff]
        %v287 = vld [vmem:[%s1 + $0x38] sm:$0xf]
        %v288 = vld [vmem:[%s1 + $0x3c] sm:$0xff]
        %v289 = vld [vmem:[%s1 + $0x44] sm:$0xf]
        %v290 = vld [vmem:[%s1 + $0x48] sm:$0xff]
        %v291 = vld [vmem:[%s1 + $0x50] sm:$0xf]
        %v292 = vld [vmem:[%s1 + $0x54] sm:$0xff]
        %v293 = vld [vmem:[%s1 + $0x5c] sm:$0xf]
        %v294 = vld [vmem:[%s1 + $0x60] sm:$0xff]
        %v295 = vld [vmem:[%s1 + $0x68] sm:$0xf]
        %v296 = vld [vmem:[%s1 + $0x6c] sm:$0xff]
        %v297 = vld [vmem:[%s1 + $0x74] sm:$0xf]
        %v298 = vld [vmem:[%s1 + $0x78] sm:$0xff]
        %v299 = vld [vmem:[%s1 + $0x80] sm:$0xf]
        %v300 = vld [vmem:[%s1 + $0x84] sm:$0xff]
        %v301 = vld [vmem:[%s1 + $0x8c] sm:$0xf]
        %v326 = vunpack.c.l.b16 %v278
        %v327 = vunpack.c.h.b16 %v278
        %v328 = vunpack.c.l.b16 %v279
        %v329 = vunpack.c.l.b16 %v280
        %v330 = vunpack.c.h.b16 %v280
        %v331 = vunpack.c.l.b16 %v281
        %v332 = vunpack.c.l.b16 %v282
        %v333 = vunpack.c.h.b16 %v282
        %v334 = vunpack.c.l.b16 %v283
        %v335 = vunpack.c.l.b16 %v284
        %v336 = vunpack.c.h.b16 %v284
        %v337 = vunpack.c.l.b16 %v285
        %v338 = vunpack.c.l.b16 %v286
        %v339 = vunpack.c.h.b16 %v286
        %v340 = vunpack.c.l.b16 %v287
        %v341 = vunpack.c.l.b16 %v288
        %v342 = vunpack.c.h.b16 %v288
        %v343 = vunpack.c.l.b16 %v289
        %v344 = vunpack.c.l.b16 %v290
        %v345 = vunpack.c.h.b16 %v290
        %v346 = vunpack.c.l.b16 %v291
        %v347 = vunpack.c.l.b16 %v292
        %v348 = vunpack.c.h.b16 %v292
        %v349 = vunpack.c.l.b16 %v293
        %v350 = vunpack.c.l.b16 %v294
        %v351 = vunpack.c.h.b16 %v294
        %v352 = vunpack.c.l.b16 %v295
        %v353 = vunpack.c.l.b16 %v296
        %v354 = vunpack.c.h.b16 %v296
        %v355 = vunpack.c.l.b16 %v297
        %v356 = vunpack.c.l.b16 %v298
        %v357 = vunpack.c.h.b16 %v298
        %v358 = vunpack.c.l.b16 %v299
        %v359 = vunpack.c.l.b16 %v300
        %v360 = vunpack.c.h.b16 %v300
        %v361 = vunpack.c.l.b16 %v301
        %v362 = vpack.c.b16 %v329, %v326
        %v363 = vpack.c.b16 %v330, %v327
        %v364 = vpack.c.b16 %v331, %v328
        %v365 = vpack.c.b16 %v335, %v332
        %v366 = vpack.c.b16 %v336, %v333
        %v367 = vpack.c.b16 %v337, %v334
        %v368 = vpack.c.b16 %v341, %v338
        %v369 = vpack.c.b16 %v342, %v339
        %v370 = vpack.c.b16 %v343, %v340
        %v371 = vpack.c.b16 %v347, %v344
        %v372 = vpack.c.b16 %v348, %v345
        %v373 = vpack.c.b16 %v349, %v346
        %v374 = vpack.c.b16 %v353, %v350
        %v375 = vpack.c.b16 %v354, %v351
        %v376 = vpack.c.b16 %v355, %v352
        %v377 = vpack.c.b16 %v359, %v356
        %v378 = vpack.c.b16 %v360, %v357
        %v379 = vpack.c.b16 %v361, %v358
        %v430 = vunpack.c.l.b16 %v240
        %v431 = vunpack.c.l.b16 %v241
        %v432 = vunpack.c.l.b16 %v242
        %v433 = vunpack.c.l.b16 %v243
        %v434 = vunpack.c.l.b16 %v244
        %v435 = vunpack.c.l.b16 %v245
        %v436 = vunpack.c.l.b16 %v246
        %v437 = vunpack.c.l.b16 %v247
        %v438 = vunpack.c.l.b16 %v248
        %v439 = vunpack.c.l.b16 %v249
        %v440 = vunpack.c.l.b16 %v250
        %v441 = vunpack.c.l.b16 %v251
        %v442 = vunpack.c.l.b16 %v252
        %v443 = vunpack.c.l.b16 %v253
        %v444 = vunpack.c.l.b16 %v254
        %v445 = vunpack.c.l.b16 %v255
        %v446 = vunpack.c.l.b16 %v256
        %v447 = vunpack.c.l.b16 %v257
        %v448 = vunpack.c.l.b16 %v258
        %v449 = vunpack.c.l.b16 %v259
        %v450 = vunpack.c.l.b16 %v260
        %v451 = vunpack.c.l.b16 %v261
        %v452 = vunpack.c.l.b16 %v262
        %v453 = vunpack.c.l.b16 %v263
        %v454 = vunpack.c.l.b16 %v264
        %v455 = vunpack.c.l.b16 %v265
        %v456 = vunpack.c.l.b16 %v266
        %v457 = vunpack.c.l.b16 %v267
        %v458 = vunpack.c.l.b16 %v268
        %v459 = vunpack.c.l.b16 %v269
        %v460 = vunpack.c.l.b16 %v270
        %v461 = vunpack.c.l.b16 %v271
        %v462 = vunpack.c.l.b16 %v272
        %v463 = vunpack.c.l.b16 %v273
        %v464 = vunpack.c.l.b16 %v274
        %v465 = vunpack.c.l.b16 %v275
        %v466 = vunpack.c.l.b16 %v276
        %v467 = vunpack.c.l.b16 %v277
        %v468 = vpack.c.b16 %v431, %v430
        %v469 = vpack.c.b16 %v433, %v432
        %v470 = vpack.c.b16 %v435, %v434
        %v471 = vpack.c.b16 %v437, %v436
        %v472 = vpack.c.b16 %v439, %v438
        %v473 = vpack.c.b16 %v441, %v440
        %v474 = vpack.c.b16 %v443, %v442
        %v475 = vpack.c.b16 %v445, %v444
        %v476 = vpack.c.b16 %v447, %v446
        %v477 = vpack.c.b16 %v449, %v448
        %v478 = vpack.c.b16 %v451, %v450
        %v479 = vpack.c.b16 %v453, %v452
        %v480 = vpack.c.b16 %v455, %v454
        %v481 = vpack.c.b16 %v457, %v456
        %v482 = vpack.c.b16 %v459, %v458
        %v483 = vpack.c.b16 %v461, %v460
        %v484 = vpack.c.b16 %v463, %v462
        %v485 = vpack.c.b16 %v465, %v464
        %v486 = vpack.c.b16 %v467, %v466
        %vm506 = vcmask 392192
        %v508 = vsel %vm506, %v364, 0
        %v511 = vsel %vm506, %v367, 0
        %v514 = vsel %vm506, %v370, 0
        %v517 = vsel %vm506, %v373, 0
        %v520 = vsel %vm506, %v376, 0
        %v523 = vsel %vm506, %v379, 0
        %525 = vmatpush.bf16.msra.mxu0 %v475
        %526 = vmatpush.bf16.msra.mxu0 %v474
        %527 = vmatpush.bf16.msra.mxu0 %v473
        %528 = vmatpush.bf16.msra.mxu0 %v472
        %529 = vmatpush.bf16.msra.mxu0 %v471
        %530 = vmatpush.bf16.msra.mxu0 %v470
        %531 = vmatpush.bf16.msra.mxu0 %v469
        %532 = vmatpush.bf16.msra.mxu0 %v468
        %533 = vmatmul.bf16.gmra.mxu0 %v362
        %v534 = vpop.f32.mrf.mxu0
        %v535 = vadd.f32 0.0, %v534
        %v536 = vpop.f32.mrf.mxu0
        %v537 = vadd.f32 0.0, %v536
        %538 = vmatmul.bf16.gmra.mxu0 %v365
        %v539 = vpop.f32.mrf.mxu0
        %v540 = vadd.f32 0.0, %v539
        %v541 = vpop.f32.mrf.mxu0
        %v542 = vadd.f32 0.0, %v541
        %543 = vmatmul.bf16.gmra.mxu0 %v368
        %v544 = vpop.f32.mrf.mxu0
        %v545 = vadd.f32 0.0, %v544
        %v546 = vpop.f32.mrf.mxu0
        %v547 = vadd.f32 0.0, %v546
        %548 = vmatmul.bf16.gmra.mxu0 %v371
        %v549 = vpop.f32.mrf.mxu0
        %v550 = vadd.f32 0.0, %v549
        %v551 = vpop.f32.mrf.mxu0
        %v552 = vadd.f32 0.0, %v551
        %553 = vmatmul.bf16.gmra.mxu0 %v374
        %v554 = vpop.f32.mrf.mxu0
        %v555 = vadd.f32 0.0, %v554
        %v556 = vpop.f32.mrf.mxu0
        %v557 = vadd.f32 0.0, %v556
        %558 = vmatmul.bf16.gmra.mxu0 %v377
        %v559 = vpop.f32.mrf.mxu0
        %v560 = vadd.f32 0.0, %v559
        %v561 = vpop.f32.mrf.mxu0
        %v562 = vadd.f32 0.0, %v561
        %563 = vdwg.mxu0
        %564 = vmatpush.bf16.msra.mxu0 %v483
        %565 = vmatpush.bf16.msra.mxu0 %v482
        %566 = vmatpush.bf16.msra.mxu0 %v481
        %567 = vmatpush.bf16.msra.mxu0 %v480
        %568 = vmatpush.bf16.msra.mxu0 %v479
        %569 = vmatpush.bf16.msra.mxu0 %v478
        %570 = vmatpush.bf16.msra.mxu0 %v477
        %571 = vmatpush.bf16.msra.mxu0 %v476
        %572 = vmatmul.bf16.gmra.mxu0 %v363
        %v573 = vpop.f32.mrf.mxu0
        %v574 = vadd.f32 %v535, %v573
        %v575 = vpop.f32.mrf.mxu0
        %v576 = vadd.f32 %v537, %v575
        %577 = vmatmul.bf16.gmra.mxu0 %v366
        %v578 = vpop.f32.mrf.mxu0
        %v579 = vadd.f32 %v540, %v578
        %v580 = vpop.f32.mrf.mxu0
        %v581 = vadd.f32 %v542, %v580
        %582 = vmatmul.bf16.gmra.mxu0 %v369
        %v583 = vpop.f32.mrf.mxu0
        %v584 = vadd.f32 %v545, %v583
        %v585 = vpop.f32.mrf.mxu0
        %v586 = vadd.f32 %v547, %v585
        %587 = vmatmul.bf16.gmra.mxu0 %v372
        %v588 = vpop.f32.mrf.mxu0
        %v589 = vadd.f32 %v550, %v588
        %v590 = vpop.f32.mrf.mxu0
        %v591 = vadd.f32 %v552, %v590
        %592 = vmatmul.bf16.gmra.mxu0 %v375
        %v593 = vpop.f32.mrf.mxu0
        %v594 = vadd.f32 %v555, %v593
        %v595 = vpop.f32.mrf.mxu0
        %v596 = vadd.f32 %v557, %v595
        %597 = vmatmul.bf16.gmra.mxu0 %v378
        %v598 = vpop.f32.mrf.mxu0
        %v599 = vadd.f32 %v560, %v598
        %v600 = vpop.f32.mrf.mxu0
        %v601 = vadd.f32 %v562, %v600
        %602 = vdwg.mxu0
        %603 = vmatpush.bf16.msra.mxu0 0
        %604 = vmatpush.bf16.msra.mxu0 0
        %605 = vmatpush.bf16.msra.mxu0 0
        %606 = vmatpush.bf16.msra.mxu0 0
        %607 = vmatpush.bf16.msra.mxu0 0
        %608 = vmatpush.bf16.msra.mxu0 %v486
        %609 = vmatpush.bf16.msra.mxu0 %v485
        %610 = vmatpush.bf16.msra.mxu0 %v484
        %611 = vmatmul.bf16.gmra.mxu0 %v508
        %v612 = vpop.f32.mrf.mxu0
        %v613 = vadd.f32 %v574, %v612
        %v614 = vpop.f32.mrf.mxu0
        %v615 = vadd.f32 %v576, %v614
        %616 = vmatmul.bf16.gmra.mxu0 %v511
        %v617 = vpop.f32.mrf.mxu0
        %v618 = vadd.f32 %v579, %v617
        %v619 = vpop.f32.mrf.mxu0
        %v620 = vadd.f32 %v581, %v619
        %621 = vmatmul.bf16.gmra.mxu0 %v514
        %v622 = vpop.f32.mrf.mxu0
        %v623 = vadd.f32 %v584, %v622
        %v624 = vpop.f32.mrf.mxu0
        %v625 = vadd.f32 %v586, %v624
        %626 = vmatmul.bf16.gmra.mxu0 %v517
        %v627 = vpop.f32.mrf.mxu0
        %v628 = vadd.f32 %v589, %v627
        %v629 = vpop.f32.mrf.mxu0
        %v630 = vadd.f32 %v591, %v629
        %631 = vmatmul.bf16.gmra.mxu0 %v520
        %v632 = vpop.f32.mrf.mxu0
        %v633 = vadd.f32 %v594, %v632
        %v634 = vpop.f32.mrf.mxu0
        %v635 = vadd.f32 %v596, %v634
        %636 = vmatmul.bf16.gmra.mxu0 %v523
        %v637 = vpop.f32.mrf.mxu0
        %v638 = vadd.f32 %v599, %v637
        %v639 = vpop.f32.mrf.mxu0
        %v640 = vadd.f32 %v601, %v639
        %641 = vdwg.mxu0
        %v642 = vmax.f32 %v613, %v615
        %v643 = vmax.f32 %v623, %v625
        %v644 = vmax.f32 %v642, %v618
        %v645 = vmax.f32 %v643, %v628
        %v646 = vmax.f32 %v644, %v620
        %v647 = vmax.f32 %v645, %v630
        %v648 = vld [vmem:[%s3] sm:$0xff]
        %s649 = scalar_lea.vmem %s3, 8
        %v650 = vld [vmem:[%s649] sm:$0xff]
        %s651 = scalar_lea.vmem %s3, 16
        %v652 = vld [vmem:[%s651] sm:$0xff]
        %s653 = scalar_lea.vmem %s3, 24
        %v654 = vld [vmem:[%s653] sm:$0xff]
        %s655 = scalar_lea.vmem %s3, 32
        %v656 = vld [vmem:[%s655] sm:$0xff]
        %s657 = scalar_lea.vmem %s3, 40
        %v658 = vld [vmem:[%s657] sm:$0xff]
        %v659 = vld [vmem:[%s2] sm:$0xff]
        %660 = vrot.lane.b32.xlu0 %v633, 32
        %v661 = vpop.permute.xlu0 %660
        %v662 = vmul.f32 %v656, %v661
        %v663 = vrot.slane %v661, 7
        %v664 = vmul.f32 %v658, %v663
        %v665 = vadd.f32 %v662, %v664
        %s666 = sld [smem:[#allocation2]]
        %667 = vrot.lane.b32.xlu0 %v665, 1
        %v668 = vpop.permute.xlu0 %667
        %v669 = vmul.f32 %v650, %v668
        %v670 = vstv %s666
        %v671 = vmul.f32 %v670, %v669
        %s672 = sld [smem:[#allocation2 + $0x1]]
        %v673 = vstv %s672
        %v674 = vmul.f32 %v673, %v665
        %v675 = vadd.f32 %v671, %v674
        %s676 = sld [smem:[#allocation2 + $0x2]]
        %677 = vrot.lane.b32.xlu0 %v665, 127
        %v678 = vpop.permute.xlu0 %677
        %v679 = vmul.f32 %v648, %v678
        %v680 = vstv %s676
        %v681 = vmul.f32 %v680, %v679
        %v682 = vadd.f32 %v675, %v681
        %s683 = sld [smem:[#allocation2 + $0x3]]
        %684 = vrot.lane.b32.xlu0 %v633, 1
        %v685 = vpop.permute.xlu0 %684
        %v686 = vmul.f32 %v650, %v685
        %v687 = vstv %s683
        %v688 = vmul.f32 %v687, %v686
        %v689 = vadd.f32 %v682, %v688
        %s690 = sld [smem:[#allocation2 + $0x4]]
        %v691 = vstv %s690
        %v692 = vmul.f32 %v691, %v633
        %v693 = vadd.f32 %v689, %v692
        %s694 = sld [smem:[#allocation2 + $0x5]]
        %695 = vrot.lane.b32.xlu0 %v633, 127
        %v696 = vpop.permute.xlu0 %695
        %v697 = vmul.f32 %v648, %v696
        %v698 = vstv %s694
        %v699 = vmul.f32 %v698, %v697
        %v700 = vadd.f32 %v693, %v699
        %701 = vrot.lane.b32.xlu0 %v633, 96
        %v702 = vpop.permute.xlu0 %701
        %v703 = vmul.f32 %v652, %v702
        %v704 = vrot.slane %v702, 1
        %v705 = vmul.f32 %v654, %v704
        %v706 = vadd.f32 %v703, %v705
        %s707 = sld [smem:[#allocation2 + $0x6]]
        %708 = vrot.lane.b32.xlu0 %v706, 1
        %v709 = vpop.permute.xlu0 %708
        %v710 = vmul.f32 %v650, %v709
        %v711 = vstv %s707
        %v712 = vmul.f32 %v711, %v710
        %v713 = vadd.f32 %v700, %v712
        %s714 = sld [smem:[#allocation2 + $0x7]]
        %v715 = vstv %s714
        %v716 = vmul.f32 %v715, %v706
        %v717 = vadd.f32 %v713, %v716
        %s718 = sld [smem:[#allocation2 + $0x8]]
        %719 = vrot.lane.b32.xlu0 %v706, 127
        %v720 = vpop.permute.xlu0 %719
        %v721 = vmul.f32 %v648, %v720
        %v722 = vstv %s718
        %v723 = vmul.f32 %v722, %v721
        %v724 = vadd.f32 %v717, %v723
        %v725 = vadd.f32 %v659, %v724
        %726 = vrot.lane.b32.xlu0 %v646, 32
        %v727 = vpop.permute.xlu0 %726
        %v728 = vmul.f32 %v656, %v727
        %v729 = vrot.slane %v727, 7
        %v730 = vmul.f32 %v658, %v729
        %v731 = vadd.f32 %v728, %v730
        %s732 = sld [smem:[#allocation2 + $0x9]]
        %733 = vrot.lane.b32.xlu0 %v731, 1
        %v734 = vpop.permute.xlu0 %733
        %v735 = vmul.f32 %v650, %v734
        %v736 = vstv %s732
        %v737 = vmul.f32 %v736, %v735
        %s738 = sld [smem:[#allocation2 + $0xa]]
        %v739 = vstv %s738
        %v740 = vmul.f32 %v739, %v731
        %v741 = vadd.f32 %v737, %v740
        %s742 = sld [smem:[#allocation2 + $0xb]]
        %743 = vrot.lane.b32.xlu0 %v731, 127
        %v744 = vpop.permute.xlu0 %743
        %v745 = vmul.f32 %v648, %v744
        %v746 = vstv %s742
        %v747 = vmul.f32 %v746, %v745
        %v748 = vadd.f32 %v741, %v747
        %s749 = sld [smem:[#allocation2 + $0xc]]
        %750 = vrot.lane.b32.xlu0 %v646, 1
        %v751 = vpop.permute.xlu0 %750
        %v752 = vmul.f32 %v650, %v751
        %v753 = vstv %s749
        %v754 = vmul.f32 %v753, %v752
        %v755 = vadd.f32 %v748, %v754
        %s756 = sld [smem:[#allocation2 + $0xd]]
        %v757 = vstv %s756
        %v758 = vmul.f32 %v757, %v646
        %v759 = vadd.f32 %v755, %v758
        %s760 = sld [smem:[#allocation2 + $0xe]]
        %761 = vrot.lane.b32.xlu0 %v646, 127
        %v762 = vpop.permute.xlu0 %761
        %v763 = vmul.f32 %v648, %v762
        %v764 = vstv %s760
        %v765 = vmul.f32 %v764, %v763
        %v766 = vadd.f32 %v759, %v765
        %767 = vrot.lane.b32.xlu0 %v646, 96
        %v768 = vpop.permute.xlu0 %767
        %v769 = vmul.f32 %v652, %v768
        %v770 = vrot.slane %v768, 1
        %v771 = vmul.f32 %v654, %v770
        %v772 = vadd.f32 %v769, %v771
        %s773 = sld [smem:[#allocation2 + $0xf]]
        %774 = vrot.lane.b32.xlu0 %v772, 1
        %v775 = vpop.permute.xlu0 %774
        %v776 = vmul.f32 %v650, %v775
        %v777 = vstv %s773
        %v778 = vmul.f32 %v777, %v776
        %v779 = vadd.f32 %v766, %v778
        %s780 = sld [smem:[#allocation2 + $0x10]]
        %v781 = vstv %s780
        %v782 = vmul.f32 %v781, %v772
        %v783 = vadd.f32 %v779, %v782
        %s784 = sld [smem:[#allocation2 + $0x11]]
        %785 = vrot.lane.b32.xlu0 %v772, 127
        %v786 = vpop.permute.xlu0 %785
        %v787 = vmul.f32 %v648, %v786
        %v788 = vstv %s784
        %v789 = vmul.f32 %v788, %v787
        %v790 = vadd.f32 %v783, %v789
        %v791 = vadd.f32 %v725, %v790
        %792 = vrot.lane.b32.xlu0 %v638, 32
        %v793 = vpop.permute.xlu0 %792
        %v794 = vmul.f32 %v656, %v793
        %v795 = vrot.slane %v793, 7
        %v796 = vmul.f32 %v658, %v795
        %v797 = vadd.f32 %v794, %v796
        %s798 = sld [smem:[#allocation2 + $0x12]]
        %799 = vrot.lane.b32.xlu0 %v797, 1
        %v800 = vpop.permute.xlu0 %799
        %v801 = vmul.f32 %v650, %v800
        %v802 = vstv %s798
        %v803 = vmul.f32 %v802, %v801
        %s804 = sld [smem:[#allocation2 + $0x13]]
        %v805 = vstv %s804
        %v806 = vmul.f32 %v805, %v797
        %v807 = vadd.f32 %v803, %v806
        %s808 = sld [smem:[#allocation2 + $0x14]]
        %809 = vrot.lane.b32.xlu0 %v797, 127
        %v810 = vpop.permute.xlu0 %809
        %v811 = vmul.f32 %v648, %v810
        %v812 = vstv %s808
        %v813 = vmul.f32 %v812, %v811
        %v814 = vadd.f32 %v807, %v813
        %s815 = sld [smem:[#allocation2 + $0x15]]
        %816 = vrot.lane.b32.xlu0 %v638, 1
        %v817 = vpop.permute.xlu0 %816
        %v818 = vmul.f32 %v650, %v817
        %v819 = vstv %s815
        %v820 = vmul.f32 %v819, %v818
        %v821 = vadd.f32 %v814, %v820
        %s822 = sld [smem:[#allocation2 + $0x16]]
        %v823 = vstv %s822
        %v824 = vmul.f32 %v823, %v638
        %v825 = vadd.f32 %v821, %v824
        %s826 = sld [smem:[#allocation2 + $0x17]]
        %827 = vrot.lane.b32.xlu0 %v638, 127
        %v828 = vpop.permute.xlu0 %827
        %v829 = vmul.f32 %v648, %v828
        %v830 = vstv %s826
        %v831 = vmul.f32 %v830, %v829
        %v832 = vadd.f32 %v825, %v831
        %833 = vrot.lane.b32.xlu0 %v638, 96
        %v834 = vpop.permute.xlu0 %833
        %v835 = vmul.f32 %v652, %v834
        %v836 = vrot.slane %v834, 1
        %v837 = vmul.f32 %v654, %v836
        %v838 = vadd.f32 %v835, %v837
        %s839 = sld [smem:[#allocation2 + $0x18]]
        %840 = vrot.lane.b32.xlu0 %v838, 1
        %v841 = vpop.permute.xlu0 %840
        %v842 = vmul.f32 %v650, %v841
        %v843 = vstv %s839
        %v844 = vmul.f32 %v843, %v842
        %v845 = vadd.f32 %v832, %v844
        %s846 = sld [smem:[#allocation2 + $0x19]]
        %v847 = vstv %s846
        %v848 = vmul.f32 %v847, %v838
        %v849 = vadd.f32 %v845, %v848
        %s850 = sld [smem:[#allocation2 + $0x1a]]
        %851 = vrot.lane.b32.xlu0 %v838, 127
        %v852 = vpop.permute.xlu0 %851
        %v853 = vmul.f32 %v648, %v852
        %v854 = vstv %s850
        %v855 = vmul.f32 %v854, %v853
        %v856 = vadd.f32 %v849, %v855
        %v857 = vadd.f32 %v791, %v856
        %s858 = scalar_lea.vmem %s2, 8
        %v859 = vld [vmem:[%s858] sm:$0xff]
        %860 = vrot.lane.b32.xlu0 %v635, 32
        %v861 = vpop.permute.xlu0 %860
        %v862 = vmul.f32 %v656, %v861
        %v863 = vrot.slane %v861, 7
        %v864 = vmul.f32 %v658, %v863
        %v865 = vadd.f32 %v862, %v864
        %s866 = sld [smem:[#allocation2 + $0x1b]]
        %867 = vrot.lane.b32.xlu0 %v865, 1
        %v868 = vpop.permute.xlu0 %867
        %v869 = vmul.f32 %v650, %v868
        %v870 = vstv %s866
        %v871 = vmul.f32 %v870, %v869
        %s872 = sld [smem:[#allocation2 + $0x1c]]
        %v873 = vstv %s872
        %v874 = vmul.f32 %v873, %v865
        %v875 = vadd.f32 %v871, %v874
        %s876 = sld [smem:[#allocation2 + $0x1d]]
        %877 = vrot.lane.b32.xlu0 %v865, 127
        %v878 = vpop.permute.xlu0 %877
        %v879 = vmul.f32 %v648, %v878
        %v880 = vstv %s876
        %v881 = vmul.f32 %v880, %v879
        %v882 = vadd.f32 %v875, %v881
        %s883 = sld [smem:[#allocation2 + $0x1e]]
        %884 = vrot.lane.b32.xlu0 %v635, 1
        %v885 = vpop.permute.xlu0 %884
        %v886 = vmul.f32 %v650, %v885
        %v887 = vstv %s883
        %v888 = vmul.f32 %v887, %v886
        %v889 = vadd.f32 %v882, %v888
        %s890 = sld [smem:[#allocation2 + $0x1f]]
        %v891 = vstv %s890
        %v892 = vmul.f32 %v891, %v635
        %v893 = vadd.f32 %v889, %v892
        %s894 = sld [smem:[#allocation2 + $0x20]]
        %895 = vrot.lane.b32.xlu0 %v635, 127
        %v896 = vpop.permute.xlu0 %895
        %v897 = vmul.f32 %v648, %v896
        %v898 = vstv %s894
        %v899 = vmul.f32 %v898, %v897
        %v900 = vadd.f32 %v893, %v899
        %901 = vrot.lane.b32.xlu0 %v635, 96
        %v902 = vpop.permute.xlu0 %901
        %v903 = vmul.f32 %v652, %v902
        %v904 = vrot.slane %v902, 1
        %v905 = vmul.f32 %v654, %v904
        %v906 = vadd.f32 %v903, %v905
        %s907 = sld [smem:[#allocation2 + $0x21]]
        %908 = vrot.lane.b32.xlu0 %v906, 1
        %v909 = vpop.permute.xlu0 %908
        %v910 = vmul.f32 %v650, %v909
        %v911 = vstv %s907
        %v912 = vmul.f32 %v911, %v910
        %v913 = vadd.f32 %v900, %v912
        %s914 = sld [smem:[#allocation2 + $0x22]]
        %v915 = vstv %s914
        %v916 = vmul.f32 %v915, %v906
        %v917 = vadd.f32 %v913, %v916
        %s918 = sld [smem:[#allocation2 + $0x23]]
        %919 = vrot.lane.b32.xlu0 %v906, 127
        %v920 = vpop.permute.xlu0 %919
        %v921 = vmul.f32 %v648, %v920
        %v922 = vstv %s918
        %v923 = vmul.f32 %v922, %v921
        %v924 = vadd.f32 %v917, %v923
        %v925 = vadd.f32 %v859, %v924
        %926 = vrot.lane.b32.xlu0 %v647, 32
        %v927 = vpop.permute.xlu0 %926
        %v928 = vmul.f32 %v656, %v927
        %v929 = vrot.slane %v927, 7
        %v930 = vmul.f32 %v658, %v929
        %v931 = vadd.f32 %v928, %v930
        %s932 = sld [smem:[#allocation2 + $0x24]]
        %933 = vrot.lane.b32.xlu0 %v931, 1
        %v934 = vpop.permute.xlu0 %933
        %v935 = vmul.f32 %v650, %v934
        %v936 = vstv %s932
        %v937 = vmul.f32 %v936, %v935
        %s938 = sld [smem:[#allocation2 + $0x25]]
        %v939 = vstv %s938
        %v940 = vmul.f32 %v939, %v931
        %v941 = vadd.f32 %v937, %v940
        %s942 = sld [smem:[#allocation2 + $0x26]]
        %943 = vrot.lane.b32.xlu0 %v931, 127
        %v944 = vpop.permute.xlu0 %943
        %v945 = vmul.f32 %v648, %v944
        %v946 = vstv %s942
        %v947 = vmul.f32 %v946, %v945
        %v948 = vadd.f32 %v941, %v947
        %s949 = sld [smem:[#allocation2 + $0x27]]
        %950 = vrot.lane.b32.xlu0 %v647, 1
        %v951 = vpop.permute.xlu0 %950
        %v952 = vmul.f32 %v650, %v951
        %v953 = vstv %s949
        %v954 = vmul.f32 %v953, %v952
        %v955 = vadd.f32 %v948, %v954
        %s956 = sld [smem:[#allocation2 + $0x28]]
        %v957 = vstv %s956
        %v958 = vmul.f32 %v957, %v647
        %v959 = vadd.f32 %v955, %v958
        %s960 = sld [smem:[#allocation2 + $0x29]]
        %961 = vrot.lane.b32.xlu0 %v647, 127
        %v962 = vpop.permute.xlu0 %961
        %v963 = vmul.f32 %v648, %v962
        %v964 = vstv %s960
        %v965 = vmul.f32 %v964, %v963
        %v966 = vadd.f32 %v959, %v965
        %967 = vrot.lane.b32.xlu0 %v647, 96
        %v968 = vpop.permute.xlu0 %967
        %v969 = vmul.f32 %v652, %v968
        %v970 = vrot.slane %v968, 1
        %v971 = vmul.f32 %v654, %v970
        %v972 = vadd.f32 %v969, %v971
        %s973 = sld [smem:[#allocation2 + $0x2a]]
        %974 = vrot.lane.b32.xlu0 %v972, 1
        %v975 = vpop.permute.xlu0 %974
        %v976 = vmul.f32 %v650, %v975
        %v977 = vstv %s973
        %v978 = vmul.f32 %v977, %v976
        %v979 = vadd.f32 %v966, %v978
        %s980 = sld [smem:[#allocation2 + $0x2b]]
        %v981 = vstv %s980
        %v982 = vmul.f32 %v981, %v972
        %v983 = vadd.f32 %v979, %v982
        %s984 = sld [smem:[#allocation2 + $0x2c]]
        %985 = vrot.lane.b32.xlu0 %v972, 127
        %v986 = vpop.permute.xlu0 %985
        %v987 = vmul.f32 %v648, %v986
        %v988 = vstv %s984
        %v989 = vmul.f32 %v988, %v987
        %v990 = vadd.f32 %v983, %v989
        %v991 = vadd.f32 %v925, %v990
        %992 = vrot.lane.b32.xlu0 %v640, 32
        %v993 = vpop.permute.xlu0 %992
        %v994 = vmul.f32 %v656, %v993
        %v995 = vrot.slane %v993, 7
        %v996 = vmul.f32 %v658, %v995
        %v997 = vadd.f32 %v994, %v996
        %s998 = sld [smem:[#allocation2 + $0x2d]]
        %999 = vrot.lane.b32.xlu0 %v997, 1
        %v1000 = vpop.permute.xlu0 %999
        %v1001 = vmul.f32 %v650, %v1000
        %v1002 = vstv %s998
        %v1003 = vmul.f32 %v1002, %v1001
        %s1004 = sld [smem:[#allocation2 + $0x2e]]
        %v1005 = vstv %s1004
        %v1006 = vmul.f32 %v1005, %v997
        %v1007 = vadd.f32 %v1003, %v1006
        %s1008 = sld [smem:[#allocation2 + $0x2f]]
        %1009 = vrot.lane.b32.xlu0 %v997, 127
        %v1010 = vpop.permute.xlu0 %1009
        %v1011 = vmul.f32 %v648, %v1010
        %v1012 = vstv %s1008
        %v1013 = vmul.f32 %v1012, %v1011
        %v1014 = vadd.f32 %v1007, %v1013
        %s1015 = sld [smem:[#allocation2 + $0x30]]
        %1016 = vrot.lane.b32.xlu0 %v640, 1
        %v1017 = vpop.permute.xlu0 %1016
        %v1018 = vmul.f32 %v650, %v1017
        %v1019 = vstv %s1015
        %v1020 = vmul.f32 %v1019, %v1018
        %v1021 = vadd.f32 %v1014, %v1020
        %s1022 = sld [smem:[#allocation2 + $0x31]]
        %v1023 = vstv %s1022
        %v1024 = vmul.f32 %v1023, %v640
        %v1025 = vadd.f32 %v1021, %v1024
        %s1026 = sld [smem:[#allocation2 + $0x32]]
        %1027 = vrot.lane.b32.xlu0 %v640, 127
        %v1028 = vpop.permute.xlu0 %1027
        %v1029 = vmul.f32 %v648, %v1028
        %v1030 = vstv %s1026
        %v1031 = vmul.f32 %v1030, %v1029
        %v1032 = vadd.f32 %v1025, %v1031
        %1033 = vrot.lane.b32.xlu0 %v640, 96
        %v1034 = vpop.permute.xlu0 %1033
        %v1035 = vmul.f32 %v652, %v1034
        %v1036 = vrot.slane %v1034, 1
        %v1037 = vmul.f32 %v654, %v1036
        %v1038 = vadd.f32 %v1035, %v1037
        %s1039 = sld [smem:[#allocation2 + $0x33]]
        %1040 = vrot.lane.b32.xlu0 %v1038, 1
        %v1041 = vpop.permute.xlu0 %1040
        %v1042 = vmul.f32 %v650, %v1041
        %v1043 = vstv %s1039
        %v1044 = vmul.f32 %v1043, %v1042
        %v1045 = vadd.f32 %v1032, %v1044
        %s1046 = sld [smem:[#allocation2 + $0x34]]
        %v1047 = vstv %s1046
        %v1048 = vmul.f32 %v1047, %v1038
        %v1049 = vadd.f32 %v1045, %v1048
        %s1050 = sld [smem:[#allocation2 + $0x35]]
        %1051 = vrot.lane.b32.xlu0 %v1038, 127
        %v1052 = vpop.permute.xlu0 %1051
        %v1053 = vmul.f32 %v648, %v1052
        %v1054 = vstv %s1050
        %v1055 = vmul.f32 %v1054, %v1053
        %v1056 = vadd.f32 %v1049, %v1055
        %v1057 = vadd.f32 %v991, %v1056
        %s1058 = sld [smem:[#allocation2 + $0x36]]
        %s1059 = sld [smem:[#allocation2 + $0x37]]
        %v1060 = vmul.f32 %v857, 0.5
        %v1061 = vtanh.pop %v1060
        %v1062 = vmul.f32 %v1061, 0.5
        %v1063 = vadd.f32 %v1062, 0.5
        %v1064 = vstv %s1058
        %v1065 = vmul.f32 %v1064, %v1063
        %v1066 = vadd.f32 %v1065, 1.0
        %v1067 = vmul.f32 %v1057, 0.5
        %v1068 = vtanh.pop %v1067
        %v1069 = vmul.f32 %v1068, 0.5
        %v1070 = vadd.f32 %v1069, 0.5
        %v1071 = vstv %s1059
        %v1072 = vmul.f32 %v1071, %v1070
        %v1073 = vadd.f32 %v1072, 1.0
        %v1074 = vmul.f32 %v613, %v1066
        %1075 = vst [vmem:[%s238] sm:$0xff] %v1074
        %v1076 = vmul.f32 %v623, %v1073
        %s1077 = scalar_lea.vmem %s238, 32
        %1078 = vst [vmem:[%s1077] sm:$0xff] %v1076
        %v1079 = vmul.f32 %v615, %v1066
        %s1080 = scalar_lea.vmem %s238, 8
        %1081 = vst [vmem:[%s1080] sm:$0xff] %v1079
        %v1082 = vmul.f32 %v625, %v1073
        %s1083 = scalar_lea.vmem %s238, 40
        %1084 = vst [vmem:[%s1083] sm:$0xff] %v1082
        %v1085 = vmul.f32 %v618, %v1066
        %s1086 = scalar_lea.vmem %s238, 16
        %1087 = vst [vmem:[%s1086] sm:$0xff] %v1085
        %v1088 = vmul.f32 %v628, %v1073
        %s1089 = scalar_lea.vmem %s238, 48
        %1090 = vst [vmem:[%s1089] sm:$0xff] %v1088
        %v1091 = vmul.f32 %v620, %v1066
        %s1092 = scalar_lea.vmem %s238, 24
        %1093 = vst [vmem:[%s1092] sm:$0xff] %v1091
        %v1094 = vmul.f32 %v630, %v1073
        %s1095 = scalar_lea.vmem %s238, 56
        %1096 = vst [vmem:[%s1095] sm:$0xff] %v1094
        %p1097 = scmp.lt.s32.totalorder %s17, 1
        %s1098 = scalar_select %p1097, %s17, 1
        %s1099 = smul.addr %s1098, 8
        %s1100 = smul.addr %s1099, 8
        %s1101 = scalar_lea.vmem %s5, %s1100
        // Predicated region
        $region45: #{forward.1} parent=39 // pred_check
          %p1102 = pneg %p145
        $region46: #{forward.1} parent=39 // pred_check_branch
          %1104 = sbr.rel (%p1102) target = $region48
        $region47: #{forward.1} parent=39 // pred_region
          _
        $region48: #{forward.1} parent=39 // pred_fallthru
          _
      $region40: #{forward.1} parent=5 // pred_fallthru
        _
      %p1105 = scmp.le.s32.totalorder 2, %s12
      // Predicated region
      $region49: #{forward.1} parent=5 // pred_check
        %p1106 = pneg %p1105
      $region50: #{forward.1} parent=5 // pred_check_branch
        %1108 = sbr.rel (%p1106) target = $region52
      $region51: #{forward.1} parent=5 // pred_region
        %s1109 = ssub.s32 %s12, 2
        // Predicated region
        $region53: #{forward.1} parent=51 // pred_check
          %p1110 = pneg %p151
        $region54: #{forward.1} parent=51 // pred_check_branch
          %1112 = sbr.rel (%p1110) target = $region56
        $region55: #{forward.1} parent=51 // pred_region
          %p1113 = scmp.lt.s32.totalorder %s18, 1
          %s1114 = scalar_select %p1113, %s18, 1
          %s1115 = smul.addr %s1114, 8
          %s1116 = smul.addr %s1115, 8
          %s1117 = scalar_lea.vmem %s5, %s1116
        $region56: #{forward.1} parent=51 // pred_fallthru
          _
      $region52: #{forward.1} parent=5 // pred_fallthru
        _
    $region6: #{forward.1} parent=1 // loop_footer
      %s16 = sadd.s32 1, %s12
    $region7: #{forward.1} parent=1 // loop_footer_branch
      %11 = sbr.rel target = $region3
    $region8: #{forward.1} parent=1 // loop_exit
      _
    %1118 = vsyncpa [#allocation3], 1
    %s1119 = scalar_lea.sflag [#allocation3], 1
    %1120 = vsyncpa %s1119, 1

</llo_original>
